<compile_context>
chip_gen: v7x
topology: tpu7x:2x2x1
jax: 0.10.0
libtpu: 0.0.40
codegen_flags: <defaults>
</compile_context>

<pallas_src>
import jax
import jax.numpy as jnp
from jax.experimental import pallas as pl
from jax.experimental.pallas import tpu as pltpu

B, L, D = 2, 8, 32          # batch, sequence length, emb_dim
H = D                       # hidden_size defaults to rec.emb_dim
V = 50                      # items_num (vocab)
MAX_NORM = 1.0              # rec.max_emb_norm


def gru_kernel(tok_ref, emb_ref, wih_ref, whh_ref, bih_ref, bhh_ref,
               fcw_ref, fcb_ref, out_ref):
    """Embedding(+max_norm) -> GRU -> last step -> Linear -> tanh (fully fused)."""
    tok = tok_ref[...]                               # (L, B) int32, time-major
    nl, nb = tok.shape
    table = emb_ref[...]                             # (V, D) f32
    nv, nd = table.shape
    nh = whh_ref.shape[0]                            # whh_T: (H, 3H)

    # --- embedding lookup as an exact one-hot matmul (no gather lowering) ---
    iota_v = jax.lax.broadcasted_iota(jnp.int32, (nl, nb, nv), 2)
    onehot = (tok[:, :, None] == iota_v).astype(jnp.float32)             # (L, B, V)
    onehot = onehot.reshape(nl * nb, nv)                                  # merge leading dims only
    x = jnp.dot(onehot, table, preferred_element_type=jnp.float32)        # (L*B, D)

    # --- max_norm renorm (matches torch embedding renorm: max_norm/(norm+1e-7)) ---
    norm = jnp.sqrt(jnp.sum(x * x, axis=-1, keepdims=True))
    scale = jnp.where(norm > MAX_NORM, MAX_NORM / (norm + 1e-7), 1.0)
    x = x * scale

    # --- all input-side gate projections in one batched matmul: (L*B, 3H) ---
    gx_all = jnp.dot(x, wih_ref[...],
                     preferred_element_type=jnp.float32) + bih_ref[...]   # (L*B, 3H)

    whh = whh_ref[...]                               # (H, 3H)
    bhh = bhh_ref[...]                               # (1, 3H)

    # --- GRU recurrence (PyTorch gate order [r, z, n]), statically unrolled over L ---
    # TODO(synk): nn.GRU(dropout=...) only applies between stacked layers; single layer => no-op.
    h = jnp.zeros((nb, nh), jnp.float32)
    for t in range(nl):                                                   # static unroll
        gx = gx_all[t * nb:(t + 1) * nb, :]                               # (B, 3H) leading-dim slice
        gh = jnp.dot(h, whh, preferred_element_type=jnp.float32) + bhh    # (B, 3H)
        r = jax.nn.sigmoid(gx[:, 0:nh] + gh[:, 0:nh])
        z = jax.nn.sigmoid(gx[:, nh:2 * nh] + gh[:, nh:2 * nh])
        n = jnp.tanh(gx[:, 2 * nh:3 * nh] + r * gh[:, 2 * nh:3 * nh])
        h = (1.0 - z) * n + z * h

    # --- dropout1 is identity at inference; Linear(H, D) + tanh ---
    # TODO(synk): Dropout(0.2) is identity (inference mode); no train-time mask/scale.
    out = jnp.dot(h, fcw_ref[...], preferred_element_type=jnp.float32) + fcb_ref[...]
    out_ref[...] = jnp.tanh(out)                                          # (B, D)


def gru_pallas(tokens, params):
    # Time-major token layout so the kernel's per-step slices are leading-dim contiguous.
    args = (tokens.T,                        # (L, B)
            params['emb'],
            params['w_ih'], params['w_hh'],
            params['b_ih'], params['b_hh'],
            params['fc_w'], params['fc_b'])
    vmem = lambda: pl.BlockSpec(memory_space=pltpu.MemorySpace.VMEM)
    return pl.pallas_call(
        gru_kernel,
        out_shape=jax.ShapeDtypeStruct((tokens.shape[0], D), jnp.float32),
        in_specs=[vmem() for _ in args],
        out_specs=vmem(),
    )(*args)


# ------------------------- pure-JAX reference -------------------------

def embed_lookup(tokens, emb_table, max_norm):
    """nn.Embedding with padding_idx=0 (row 0 is zero) and max_norm renorm."""
    e = jnp.take(emb_table, tokens, axis=0)                     # (B, L, D)
    norm = jnp.sqrt(jnp.sum(e * e, axis=-1, keepdims=True))
    scale = jnp.where(norm > max_norm, max_norm / (norm + 1e-7), 1.0)
    return e * scale


def ref_forward(tokens, emb_table, w_ih, w_hh, b_ih, b_hh, fc_w_pt, fc_b, max_norm):
    """Mirrors PyTorch: Embedding -> GRU (gate order r,z,n) -> last step -> Linear -> tanh."""
    x = embed_lookup(tokens, emb_table, max_norm)               # (B, L, D)
    nb, nl, _ = x.shape
    nh = w_hh.shape[1]                                          # w_hh: (3H, H)
    h = jnp.zeros((nb, nh), jnp.float32)
    for t in range(nl):
        xt = x[:, t, :]
        gx = xt @ w_ih.T + b_ih
        gh = h @ w_hh.T + b_hh
        r = jax.nn.sigmoid(gx[:, :nh] + gh[:, :nh])
        z = jax.nn.sigmoid(gx[:, nh:2 * nh] + gh[:, nh:2 * nh])
        n = jnp.tanh(gx[:, 2 * nh:] + r * gh[:, 2 * nh:])
        h = (1.0 - z) * n + z * h
    return jnp.tanh(h @ fc_w_pt.T + fc_b)                       # (B, D)


if __name__ == "__main__":
    key = jax.random.PRNGKey(0)
    ks = jax.random.split(key, 10)

    # --- deterministic parameter init (shapes from RNN.__init__ with GRU) ---
    emb_table = 0.5 * jax.random.normal(ks[0], (V, D), jnp.float32)
    emb_table = emb_table.at[0].set(0.0)                        # padding_idx=0

    bound = 1.0 / float(H) ** 0.5
    w_ih = jax.random.uniform(ks[1], (3 * H, D), jnp.float32, -bound, bound)  # (3H, D)
    w_hh = jax.random.uniform(ks[2], (3 * H, H), jnp.float32, -bound, bound)  # (3H, H)
    b_ih = jax.random.uniform(ks[3], (3 * H,), jnp.float32, -bound, bound)
    b_hh = jax.random.uniform(ks[4], (3 * H,), jnp.float32, -bound, bound)

    fc_w_pt = jax.random.uniform(ks[5], (D, H), jnp.float32, -bound, bound)   # (out, in)
    fc_b = jax.random.uniform(ks[6], (D,), jnp.float32, -bound, bound)

    params = {
        'emb': emb_table,                       # (V, D)
        'w_ih': w_ih.T,                         # (D, 3H)
        'w_hh': w_hh.T,                         # (H, 3H)
        'b_ih': b_ih.reshape(1, 3 * H),         # (1, 3H)
        'b_hh': b_hh.reshape(1, 3 * H),         # (1, 3H)
        'fc_w': fc_w_pt.T,                      # (H, D)
        'fc_b': fc_b.reshape(1, D),             # (1, D)
    }

    # --- inputs: integer token ids, including padding id 0 ---
    tokens = jax.random.randint(ks[7], (B, L), 0, V, dtype=jnp.int32)
    tokens = tokens.at[0, -2:].set(0)           # some padding

    # --- fused Pallas forward ---
    out = gru_pallas(tokens, params)
    out = jax.block_until_ready(out)

    # --- check against pure-JAX reference ---
    ref = ref_forward(tokens, emb_table, w_ih, w_hh, b_ih, b_hh, fc_w_pt,
                      fc_b.reshape(1, D), MAX_NORM)
    ref = jax.block_until_ready(ref)
    assert out.shape == (B, D)
    assert jnp.allclose(out, ref, atol=1e-3, rtol=1e-3), (
        f"max abs err {jnp.max(jnp.abs(out - ref))}")

    print("KERNEL_OK")
</pallas_src>

<mosaic_0001>
module attributes {stable_mosaic.version = 11 : i64} {
  func.func @gru_kernel(%arg0: memref<8x2xi32, #tpu.memory_space<vmem>>, %arg1: memref<50x32xf32, #tpu.memory_space<vmem>>, %arg2: memref<32x96xf32, #tpu.memory_space<vmem>>, %arg3: memref<32x96xf32, #tpu.memory_space<vmem>>, %arg4: memref<1x96xf32, #tpu.memory_space<vmem>>, %arg5: memref<1x96xf32, #tpu.memory_space<vmem>>, %arg6: memref<32x32xf32, #tpu.memory_space<vmem>>, %arg7: memref<1x32xf32, #tpu.memory_space<vmem>>, %arg8: memref<2x32xf32, #tpu.memory_space<vmem>>) attributes {dimension_semantics = [], scalar_prefetch = 0 : i64, scratch_operands = 0 : i64, tpu.core_type = #tpu.core_type<tc>} {
    %c0 = arith.constant 0 : index
    %c0_0 = arith.constant 0 : index
    %0 = vector.load %arg0[%c0, %c0_0] : memref<8x2xi32, #tpu.memory_space<vmem>>, vector<8x2xi32>
    %c0_1 = arith.constant 0 : index
    %c0_2 = arith.constant 0 : index
    %1 = vector.load %arg1[%c0_1, %c0_2] : memref<50x32xf32, #tpu.memory_space<vmem>>, vector<50x32xf32>
    %2 = tpu.iota {dimensions = array<i32: 2>} : vector<8x2x50xi32>
    %3 = vector.shape_cast %0 : vector<8x2xi32> to vector<8x2x1xi32>
    %4 = vector.broadcast %3 : vector<8x2x1xi32> to vector<8x2x50xi32>
    %5 = arith.cmpi eq, %4, %2 : vector<8x2x50xi32>
    %6 = arith.extui %5 : vector<8x2x50xi1> to vector<8x2x50xi32>
    %7 = arith.sitofp %6 : vector<8x2x50xi32> to vector<8x2x50xf32>
    %8 = vector.shape_cast %7 : vector<8x2x50xf32> to vector<16x50xf32>
    %cst = arith.constant dense<0.000000e+00> : vector<16x32xf32>
    %9 = tpu.matmul %8, %1, %cst {dimension_numbers = #tpu.dot_dimension_numbers<[1], [0], [0], [1], [0, 0, 1, 1], [], []>} : vector<16x50xf32>, vector<50x32xf32>, vector<16x32xf32> -> vector<16x32xf32>
    %10 = arith.mulf %9, %9 : vector<16x32xf32>
    %cst_3 = arith.constant dense<0.000000e+00> : vector<16xf32>
    %11 = vector.multi_reduction <add>, %10, %cst_3 [1] : vector<16x32xf32> to vector<16xf32>
    %12 = vector.shape_cast %11 : vector<16xf32> to vector<16x1xf32>
    %13 = math.sqrt %12 : vector<16x1xf32>
    %cst_4 = arith.constant 1.000000e+00 : f32
    %14 = vector.broadcast %cst_4 : f32 to vector<16x1xf32>
    %15 = arith.cmpf ogt, %13, %14 : vector<16x1xf32>
    %cst_5 = arith.constant 1.000000e-07 : f32
    %16 = vector.broadcast %cst_5 : f32 to vector<16x1xf32>
    %17 = arith.addf %13, %16 : vector<16x1xf32>
    %cst_6 = arith.constant 1.000000e+00 : f32
    %18 = vector.broadcast %cst_6 : f32 to vector<16x1xf32>
    %19 = arith.divf %18, %17 : vector<16x1xf32>
    %cst_7 = arith.constant 1.000000e+00 : f32
    %20 = vector.broadcast %cst_7 : f32 to vector<16x1xf32>
    %21 = arith.select %15, %19, %20 : vector<16x1xi1>, vector<16x1xf32>
    %22 = vector.broadcast %21 : vector<16x1xf32> to vector<16x32xf32>
    %23 = arith.mulf %9, %22 : vector<16x32xf32>
    %c0_8 = arith.constant 0 : index
    %c0_9 = arith.constant 0 : index
    %24 = vector.load %arg2[%c0_8, %c0_9] : memref<32x96xf32, #tpu.memory_space<vmem>>, vector<32x96xf32>
    %cst_10 = arith.constant dense<0.000000e+00> : vector<16x96xf32>
    %25 = tpu.matmul %23, %24, %cst_10 {dimension_numbers = #tpu.dot_dimension_numbers<[1], [0], [0], [1], [0, 0, 1, 1], [], []>} : vector<16x32xf32>, vector<32x96xf32>, vector<16x96xf32> -> vector<16x96xf32>
    %c0_11 = arith.constant 0 : index
    %c0_12 = arith.constant 0 : index
    %26 = vector.load %arg4[%c0_11, %c0_12] : memref<1x96xf32, #tpu.memory_space<vmem>>, vector<1x96xf32>
    %27 = vector.broadcast %26 : vector<1x96xf32> to vector<16x96xf32>
    %28 = arith.addf %25, %27 : vector<16x96xf32>
    %c0_13 = arith.constant 0 : index
    %c0_14 = arith.constant 0 : index
    %29 = vector.load %arg3[%c0_13, %c0_14] : memref<32x96xf32, #tpu.memory_space<vmem>>, vector<32x96xf32>
    %c0_15 = arith.constant 0 : index
    %c0_16 = arith.constant 0 : index
    %30 = vector.load %arg5[%c0_15, %c0_16] : memref<1x96xf32, #tpu.memory_space<vmem>>, vector<1x96xf32>
    %cst_17 = arith.constant 0.000000e+00 : f32
    %31 = vector.broadcast %cst_17 : f32 to vector<2x32xf32>
    %32 = vector.extract_strided_slice %28 {offsets = [0, 0], sizes = [2, 96], strides = [1, 1]} : vector<16x96xf32> to vector<2x96xf32>
    %cst_18 = arith.constant dense<0.000000e+00> : vector<2x96xf32>
    %33 = tpu.matmul %31, %29, %cst_18 {dimension_numbers = #tpu.dot_dimension_numbers<[1], [0], [0], [1], [0, 0, 1, 1], [], []>} : vector<2x32xf32>, vector<32x96xf32>, vector<2x96xf32> -> vector<2x96xf32>
    %34 = vector.broadcast %30 : vector<1x96xf32> to vector<2x96xf32>
    %35 = arith.addf %33, %34 : vector<2x96xf32>
    %36 = vector.extract_strided_slice %32 {offsets = [0, 0], sizes = [2, 32], strides = [1, 1]} : vector<2x96xf32> to vector<2x32xf32>
    %37 = vector.extract_strided_slice %35 {offsets = [0, 0], sizes = [2, 32], strides = [1, 1]} : vector<2x96xf32> to vector<2x32xf32>
    %38 = arith.addf %36, %37 : vector<2x32xf32>
    %39 = arith.negf %38 : vector<2x32xf32>
    %40 = math.exp %39 : vector<2x32xf32>
    %cst_19 = arith.constant 1.000000e+00 : f32
    %41 = vector.broadcast %cst_19 : f32 to vector<2x32xf32>
    %42 = arith.addf %41, %40 : vector<2x32xf32>
    %43 = arith.divf %41, %42 : vector<2x32xf32>
    %44 = vector.extract_strided_slice %32 {offsets = [0, 32], sizes = [2, 32], strides = [1, 1]} : vector<2x96xf32> to vector<2x32xf32>
    %45 = vector.extract_strided_slice %35 {offsets = [0, 32], sizes = [2, 32], strides = [1, 1]} : vector<2x96xf32> to vector<2x32xf32>
    %46 = arith.addf %44, %45 : vector<2x32xf32>
    %47 = arith.negf %46 : vector<2x32xf32>
    %48 = math.exp %47 : vector<2x32xf32>
    %cst_20 = arith.constant 1.000000e+00 : f32
    %49 = vector.broadcast %cst_20 : f32 to vector<2x32xf32>
    %50 = arith.addf %49, %48 : vector<2x32xf32>
    %51 = arith.divf %49, %50 : vector<2x32xf32>
    %52 = vector.extract_strided_slice %32 {offsets = [0, 64], sizes = [2, 32], strides = [1, 1]} : vector<2x96xf32> to vector<2x32xf32>
    %53 = vector.extract_strided_slice %35 {offsets = [0, 64], sizes = [2, 32], strides = [1, 1]} : vector<2x96xf32> to vector<2x32xf32>
    %54 = arith.mulf %43, %53 : vector<2x32xf32>
    %55 = arith.addf %52, %54 : vector<2x32xf32>
    %56 = math.tanh %55 : vector<2x32xf32>
    %cst_21 = arith.constant 1.000000e+00 : f32
    %57 = vector.broadcast %cst_21 : f32 to vector<2x32xf32>
    %58 = arith.subf %57, %51 : vector<2x32xf32>
    %59 = arith.mulf %58, %56 : vector<2x32xf32>
    %60 = arith.mulf %51, %31 : vector<2x32xf32>
    %61 = arith.addf %59, %60 : vector<2x32xf32>
    %62 = vector.extract_strided_slice %28 {offsets = [2, 0], sizes = [2, 96], strides = [1, 1]} : vector<16x96xf32> to vector<2x96xf32>
    %cst_22 = arith.constant dense<0.000000e+00> : vector<2x96xf32>
    %63 = tpu.matmul %61, %29, %cst_22 {dimension_numbers = #tpu.dot_dimension_numbers<[1], [0], [0], [1], [0, 0, 1, 1], [], []>} : vector<2x32xf32>, vector<32x96xf32>, vector<2x96xf32> -> vector<2x96xf32>
    %64 = vector.broadcast %30 : vector<1x96xf32> to vector<2x96xf32>
    %65 = arith.addf %63, %64 : vector<2x96xf32>
    %66 = vector.extract_strided_slice %62 {offsets = [0, 0], sizes = [2, 32], strides = [1, 1]} : vector<2x96xf32> to vector<2x32xf32>
    %67 = vector.extract_strided_slice %65 {offsets = [0, 0], sizes = [2, 32], strides = [1, 1]} : vector<2x96xf32> to vector<2x32xf32>
    %68 = arith.addf %66, %67 : vector<2x32xf32>
    %69 = arith.negf %68 : vector<2x32xf32>
    %70 = math.exp %69 : vector<2x32xf32>
    %cst_23 = arith.constant 1.000000e+00 : f32
    %71 = vector.broadcast %cst_23 : f32 to vector<2x32xf32>
    %72 = arith.addf %71, %70 : vector<2x32xf32>
    %73 = arith.divf %71, %72 : vector<2x32xf32>
    %74 = vector.extract_strided_slice %62 {offsets = [0, 32], sizes = [2, 32], strides = [1, 1]} : vector<2x96xf32> to vector<2x32xf32>
    %75 = vector.extract_strided_slice %65 {offsets = [0, 32], sizes = [2, 32], strides = [1, 1]} : vector<2x96xf32> to vector<2x32xf32>
    %76 = arith.addf %74, %75 : vector<2x32xf32>
    %77 = arith.negf %76 : vector<2x32xf32>
    %78 = math.exp %77 : vector<2x32xf32>
    %cst_24 = arith.constant 1.000000e+00 : f32
    %79 = vector.broadcast %cst_24 : f32 to vector<2x32xf32>
    %80 = arith.addf %79, %78 : vector<2x32xf32>
    %81 = arith.divf %79, %80 : vector<2x32xf32>
    %82 = vector.extract_strided_slice %62 {offsets = [0, 64], sizes = [2, 32], strides = [1, 1]} : vector<2x96xf32> to vector<2x32xf32>
    %83 = vector.extract_strided_slice %65 {offsets = [0, 64], sizes = [2, 32], strides = [1, 1]} : vector<2x96xf32> to vector<2x32xf32>
    %84 = arith.mulf %73, %83 : vector<2x32xf32>
    %85 = arith.addf %82, %84 : vector<2x32xf32>
    %86 = math.tanh %85 : vector<2x32xf32>
    %cst_25 = arith.constant 1.000000e+00 : f32
    %87 = vector.broadcast %cst_25 : f32 to vector<2x32xf32>
    %88 = arith.subf %87, %81 : vector<2x32xf32>
    %89 = arith.mulf %88, %86 : vector<2x32xf32>
    %90 = arith.mulf %81, %61 : vector<2x32xf32>
    %91 = arith.addf %89, %90 : vector<2x32xf32>
    %92 = vector.extract_strided_slice %28 {offsets = [4, 0], sizes = [2, 96], strides = [1, 1]} : vector<16x96xf32> to vector<2x96xf32>
    %cst_26 = arith.constant dense<0.000000e+00> : vector<2x96xf32>
    %93 = tpu.matmul %91, %29, %cst_26 {dimension_numbers = #tpu.dot_dimension_numbers<[1], [0], [0], [1], [0, 0, 1, 1], [], []>} : vector<2x32xf32>, vector<32x96xf32>, vector<2x96xf32> -> vector<2x96xf32>
    %94 = vector.broadcast %30 : vector<1x96xf32> to vector<2x96xf32>
    %95 = arith.addf %93, %94 : vector<2x96xf32>
    %96 = vector.extract_strided_slice %92 {offsets = [0, 0], sizes = [2, 32], strides = [1, 1]} : vector<2x96xf32> to vector<2x32xf32>
    %97 = vector.extract_strided_slice %95 {offsets = [0, 0], sizes = [2, 32], strides = [1, 1]} : vector<2x96xf32> to vector<2x32xf32>
    %98 = arith.addf %96, %97 : vector<2x32xf32>
    %99 = arith.negf %98 : vector<2x32xf32>
    %100 = math.exp %99 : vector<2x32xf32>
    %cst_27 = arith.constant 1.000000e+00 : f32
    %101 = vector.broadcast %cst_27 : f32 to vector<2x32xf32>
    %102 = arith.addf %101, %100 : vector<2x32xf32>
    %103 = arith.divf %101, %102 : vector<2x32xf32>
    %104 = vector.extract_strided_slice %92 {offsets = [0, 32], sizes = [2, 32], strides = [1, 1]} : vector<2x96xf32> to vector<2x32xf32>
    %105 = vector.extract_strided_slice %95 {offsets = [0, 32], sizes = [2, 32], strides = [1, 1]} : vector<2x96xf32> to vector<2x32xf32>
    %106 = arith.addf %104, %105 : vector<2x32xf32>
    %107 = arith.negf %106 : vector<2x32xf32>
    %108 = math.exp %107 : vector<2x32xf32>
    %cst_28 = arith.constant 1.000000e+00 : f32
    %109 = vector.broadcast %cst_28 : f32 to vector<2x32xf32>
    %110 = arith.addf %109, %108 : vector<2x32xf32>
    %111 = arith.divf %109, %110 : vector<2x32xf32>
    %112 = vector.extract_strided_slice %92 {offsets = [0, 64], sizes = [2, 32], strides = [1, 1]} : vector<2x96xf32> to vector<2x32xf32>
    %113 = vector.extract_strided_slice %95 {offsets = [0, 64], sizes = [2, 32], strides = [1, 1]} : vector<2x96xf32> to vector<2x32xf32>
    %114 = arith.mulf %103, %113 : vector<2x32xf32>
    %115 = arith.addf %112, %114 : vector<2x32xf32>
    %116 = math.tanh %115 : vector<2x32xf32>
    %cst_29 = arith.constant 1.000000e+00 : f32
    %117 = vector.broadcast %cst_29 : f32 to vector<2x32xf32>
    %118 = arith.subf %117, %111 : vector<2x32xf32>
    %119 = arith.mulf %118, %116 : vector<2x32xf32>
    %120 = arith.mulf %111, %91 : vector<2x32xf32>
    %121 = arith.addf %119, %120 : vector<2x32xf32>
    %122 = vector.extract_strided_slice %28 {offsets = [6, 0], sizes = [2, 96], strides = [1, 1]} : vector<16x96xf32> to vector<2x96xf32>
    %cst_30 = arith.constant dense<0.000000e+00> : vector<2x96xf32>
    %123 = tpu.matmul %121, %29, %cst_30 {dimension_numbers = #tpu.dot_dimension_numbers<[1], [0], [0], [1], [0, 0, 1, 1], [], []>} : vector<2x32xf32>, vector<32x96xf32>, vector<2x96xf32> -> vector<2x96xf32>
    %124 = vector.broadcast %30 : vector<1x96xf32> to vector<2x96xf32>
    %125 = arith.addf %123, %124 : vector<2x96xf32>
    %126 = vector.extract_strided_slice %122 {offsets = [0, 0], sizes = [2, 32], strides = [1, 1]} : vector<2x96xf32> to vector<2x32xf32>
    %127 = vector.extract_strided_slice %125 {offsets = [0, 0], sizes = [2, 32], strides = [1, 1]} : vector<2x96xf32> to vector<2x32xf32>
    %128 = arith.addf %126, %127 : vector<2x32xf32>
    %129 = arith.negf %128 : vector<2x32xf32>
    %130 = math.exp %129 : vector<2x32xf32>
    %cst_31 = arith.constant 1.000000e+00 : f32
    %131 = vector.broadcast %cst_31 : f32 to vector<2x32xf32>
    %132 = arith.addf %131, %130 : vector<2x32xf32>
    %133 = arith.divf %131, %132 : vector<2x32xf32>
    %134 = vector.extract_strided_slice %122 {offsets = [0, 32], sizes = [2, 32], strides = [1, 1]} : vector<2x96xf32> to vector<2x32xf32>
    %135 = vector.extract_strided_slice %125 {offsets = [0, 32], sizes = [2, 32], strides = [1, 1]} : vector<2x96xf32> to vector<2x32xf32>
    %136 = arith.addf %134, %135 : vector<2x32xf32>
    %137 = arith.negf %136 : vector<2x32xf32>
    %138 = math.exp %137 : vector<2x32xf32>
    %cst_32 = arith.constant 1.000000e+00 : f32
    %139 = vector.broadcast %cst_32 : f32 to vector<2x32xf32>
    %140 = arith.addf %139, %138 : vector<2x32xf32>
    %141 = arith.divf %139, %140 : vector<2x32xf32>
    %142 = vector.extract_strided_slice %122 {offsets = [0, 64], sizes = [2, 32], strides = [1, 1]} : vector<2x96xf32> to vector<2x32xf32>
    %143 = vector.extract_strided_slice %125 {offsets = [0, 64], sizes = [2, 32], strides = [1, 1]} : vector<2x96xf32> to vector<2x32xf32>
    %144 = arith.mulf %133, %143 : vector<2x32xf32>
    %145 = arith.addf %142, %144 : vector<2x32xf32>
    %146 = math.tanh %145 : vector<2x32xf32>
    %cst_33 = arith.constant 1.000000e+00 : f32
    %147 = vector.broadcast %cst_33 : f32 to vector<2x32xf32>
    %148 = arith.subf %147, %141 : vector<2x32xf32>
    %149 = arith.mulf %148, %146 : vector<2x32xf32>
    %150 = arith.mulf %141, %121 : vector<2x32xf32>
    %151 = arith.addf %149, %150 : vector<2x32xf32>
    %152 = vector.extract_strided_slice %28 {offsets = [8, 0], sizes = [2, 96], strides = [1, 1]} : vector<16x96xf32> to vector<2x96xf32>
    %cst_34 = arith.constant dense<0.000000e+00> : vector<2x96xf32>
    %153 = tpu.matmul %151, %29, %cst_34 {dimension_numbers = #tpu.dot_dimension_numbers<[1], [0], [0], [1], [0, 0, 1, 1], [], []>} : vector<2x32xf32>, vector<32x96xf32>, vector<2x96xf32> -> vector<2x96xf32>
    %154 = vector.broadcast %30 : vector<1x96xf32> to vector<2x96xf32>
    %155 = arith.addf %153, %154 : vector<2x96xf32>
    %156 = vector.extract_strided_slice %152 {offsets = [0, 0], sizes = [2, 32], strides = [1, 1]} : vector<2x96xf32> to vector<2x32xf32>
    %157 = vector.extract_strided_slice %155 {offsets = [0, 0], sizes = [2, 32], strides = [1, 1]} : vector<2x96xf32> to vector<2x32xf32>
    %158 = arith.addf %156, %157 : vector<2x32xf32>
    %159 = arith.negf %158 : vector<2x32xf32>
    %160 = math.exp %159 : vector<2x32xf32>
    %cst_35 = arith.constant 1.000000e+00 : f32
    %161 = vector.broadcast %cst_35 : f32 to vector<2x32xf32>
    %162 = arith.addf %161, %160 : vector<2x32xf32>
    %163 = arith.divf %161, %162 : vector<2x32xf32>
    %164 = vector.extract_strided_slice %152 {offsets = [0, 32], sizes = [2, 32], strides = [1, 1]} : vector<2x96xf32> to vector<2x32xf32>
    %165 = vector.extract_strided_slice %155 {offsets = [0, 32], sizes = [2, 32], strides = [1, 1]} : vector<2x96xf32> to vector<2x32xf32>
    %166 = arith.addf %164, %165 : vector<2x32xf32>
    %167 = arith.negf %166 : vector<2x32xf32>
    %168 = math.exp %167 : vector<2x32xf32>
    %cst_36 = arith.constant 1.000000e+00 : f32
    %169 = vector.broadcast %cst_36 : f32 to vector<2x32xf32>
    %170 = arith.addf %169, %168 : vector<2x32xf32>
    %171 = arith.divf %169, %170 : vector<2x32xf32>
    %172 = vector.extract_strided_slice %152 {offsets = [0, 64], sizes = [2, 32], strides = [1, 1]} : vector<2x96xf32> to vector<2x32xf32>
    %173 = vector.extract_strided_slice %155 {offsets = [0, 64], sizes = [2, 32], strides = [1, 1]} : vector<2x96xf32> to vector<2x32xf32>
    %174 = arith.mulf %163, %173 : vector<2x32xf32>
    %175 = arith.addf %172, %174 : vector<2x32xf32>
    %176 = math.tanh %175 : vector<2x32xf32>
    %cst_37 = arith.constant 1.000000e+00 : f32
    %177 = vector.broadcast %cst_37 : f32 to vector<2x32xf32>
    %178 = arith.subf %177, %171 : vector<2x32xf32>
    %179 = arith.mulf %178, %176 : vector<2x32xf32>
    %180 = arith.mulf %171, %151 : vector<2x32xf32>
    %181 = arith.addf %179, %180 : vector<2x32xf32>
    %182 = vector.extract_strided_slice %28 {offsets = [10, 0], sizes = [2, 96], strides = [1, 1]} : vector<16x96xf32> to vector<2x96xf32>
    %cst_38 = arith.constant dense<0.000000e+00> : vector<2x96xf32>
    %183 = tpu.matmul %181, %29, %cst_38 {dimension_numbers = #tpu.dot_dimension_numbers<[1], [0], [0], [1], [0, 0, 1, 1], [], []>} : vector<2x32xf32>, vector<32x96xf32>, vector<2x96xf32> -> vector<2x96xf32>
    %184 = vector.broadcast %30 : vector<1x96xf32> to vector<2x96xf32>
    %185 = arith.addf %183, %184 : vector<2x96xf32>
    %186 = vector.extract_strided_slice %182 {offsets = [0, 0], sizes = [2, 32], strides = [1, 1]} : vector<2x96xf32> to vector<2x32xf32>
    %187 = vector.extract_strided_slice %185 {offsets = [0, 0], sizes = [2, 32], strides = [1, 1]} : vector<2x96xf32> to vector<2x32xf32>
    %188 = arith.addf %186, %187 : vector<2x32xf32>
    %189 = arith.negf %188 : vector<2x32xf32>
    %190 = math.exp %189 : vector<2x32xf32>
    %cst_39 = arith.constant 1.000000e+00 : f32
    %191 = vector.broadcast %cst_39 : f32 to vector<2x32xf32>
    %192 = arith.addf %191, %190 : vector<2x32xf32>
    %193 = arith.divf %191, %192 : vector<2x32xf32>
    %194 = vector.extract_strided_slice %182 {offsets = [0, 32], sizes = [2, 32], strides = [1, 1]} : vector<2x96xf32> to vector<2x32xf32>
    %195 = vector.extract_strided_slice %185 {offsets = [0, 32], sizes = [2, 32], strides = [1, 1]} : vector<2x96xf32> to vector<2x32xf32>
    %196 = arith.addf %194, %195 : vector<2x32xf32>
    %197 = arith.negf %196 : vector<2x32xf32>
    %198 = math.exp %197 : vector<2x32xf32>
    %cst_40 = arith.constant 1.000000e+00 : f32
    %199 = vector.broadcast %cst_40 : f32 to vector<2x32xf32>
    %200 = arith.addf %199, %198 : vector<2x32xf32>
    %201 = arith.divf %199, %200 : vector<2x32xf32>
    %202 = vector.extract_strided_slice %182 {offsets = [0, 64], sizes = [2, 32], strides = [1, 1]} : vector<2x96xf32> to vector<2x32xf32>
    %203 = vector.extract_strided_slice %185 {offsets = [0, 64], sizes = [2, 32], strides = [1, 1]} : vector<2x96xf32> to vector<2x32xf32>
    %204 = arith.mulf %193, %203 : vector<2x32xf32>
    %205 = arith.addf %202, %204 : vector<2x32xf32>
    %206 = math.tanh %205 : vector<2x32xf32>
    %cst_41 = arith.constant 1.000000e+00 : f32
    %207 = vector.broadcast %cst_41 : f32 to vector<2x32xf32>
    %208 = arith.subf %207, %201 : vector<2x32xf32>
    %209 = arith.mulf %208, %206 : vector<2x32xf32>
    %210 = arith.mulf %201, %181 : vector<2x32xf32>
    %211 = arith.addf %209, %210 : vector<2x32xf32>
    %212 = vector.extract_strided_slice %28 {offsets = [12, 0], sizes = [2, 96], strides = [1, 1]} : vector<16x96xf32> to vector<2x96xf32>
    %cst_42 = arith.constant dense<0.000000e+00> : vector<2x96xf32>
    %213 = tpu.matmul %211, %29, %cst_42 {dimension_numbers = #tpu.dot_dimension_numbers<[1], [0], [0], [1], [0, 0, 1, 1], [], []>} : vector<2x32xf32>, vector<32x96xf32>, vector<2x96xf32> -> vector<2x96xf32>
    %214 = vector.broadcast %30 : vector<1x96xf32> to vector<2x96xf32>
    %215 = arith.addf %213, %214 : vector<2x96xf32>
    %216 = vector.extract_strided_slice %212 {offsets = [0, 0], sizes = [2, 32], strides = [1, 1]} : vector<2x96xf32> to vector<2x32xf32>
    %217 = vector.extract_strided_slice %215 {offsets = [0, 0], sizes = [2, 32], strides = [1, 1]} : vector<2x96xf32> to vector<2x32xf32>
    %218 = arith.addf %216, %217 : vector<2x32xf32>
    %219 = arith.negf %218 : vector<2x32xf32>
    %220 = math.exp %219 : vector<2x32xf32>
    %cst_43 = arith.constant 1.000000e+00 : f32
    %221 = vector.broadcast %cst_43 : f32 to vector<2x32xf32>
    %222 = arith.addf %221, %220 : vector<2x32xf32>
    %223 = arith.divf %221, %222 : vector<2x32xf32>
    %224 = vector.extract_strided_slice %212 {offsets = [0, 32], sizes = [2, 32], strides = [1, 1]} : vector<2x96xf32> to vector<2x32xf32>
    %225 = vector.extract_strided_slice %215 {offsets = [0, 32], sizes = [2, 32], strides = [1, 1]} : vector<2x96xf32> to vector<2x32xf32>
    %226 = arith.addf %224, %225 : vector<2x32xf32>
    %227 = arith.negf %226 : vector<2x32xf32>
    %228 = math.exp %227 : vector<2x32xf32>
    %cst_44 = arith.constant 1.000000e+00 : f32
    %229 = vector.broadcast %cst_44 : f32 to vector<2x32xf32>
    %230 = arith.addf %229, %228 : vector<2x32xf32>
    %231 = arith.divf %229, %230 : vector<2x32xf32>
    %232 = vector.extract_strided_slice %212 {offsets = [0, 64], sizes = [2, 32], strides = [1, 1]} : vector<2x96xf32> to vector<2x32xf32>
    %233 = vector.extract_strided_slice %215 {offsets = [0, 64], sizes = [2, 32], strides = [1, 1]} : vector<2x96xf32> to vector<2x32xf32>
    %234 = arith.mulf %223, %233 : vector<2x32xf32>
    %235 = arith.addf %232, %234 : vector<2x32xf32>
    %236 = math.tanh %235 : vector<2x32xf32>
    %cst_45 = arith.constant 1.000000e+00 : f32
    %237 = vector.broadcast %cst_45 : f32 to vector<2x32xf32>
    %238 = arith.subf %237, %231 : vector<2x32xf32>
    %239 = arith.mulf %238, %236 : vector<2x32xf32>
    %240 = arith.mulf %231, %211 : vector<2x32xf32>
    %241 = arith.addf %239, %240 : vector<2x32xf32>
    %242 = vector.extract_strided_slice %28 {offsets = [14, 0], sizes = [2, 96], strides = [1, 1]} : vector<16x96xf32> to vector<2x96xf32>
    %cst_46 = arith.constant dense<0.000000e+00> : vector<2x96xf32>
    %243 = tpu.matmul %241, %29, %cst_46 {dimension_numbers = #tpu.dot_dimension_numbers<[1], [0], [0], [1], [0, 0, 1, 1], [], []>} : vector<2x32xf32>, vector<32x96xf32>, vector<2x96xf32> -> vector<2x96xf32>
    %244 = vector.broadcast %30 : vector<1x96xf32> to vector<2x96xf32>
    %245 = arith.addf %243, %244 : vector<2x96xf32>
    %246 = vector.extract_strided_slice %242 {offsets = [0, 0], sizes = [2, 32], strides = [1, 1]} : vector<2x96xf32> to vector<2x32xf32>
    %247 = vector.extract_strided_slice %245 {offsets = [0, 0], sizes = [2, 32], strides = [1, 1]} : vector<2x96xf32> to vector<2x32xf32>
    %248 = arith.addf %246, %247 : vector<2x32xf32>
    %249 = arith.negf %248 : vector<2x32xf32>
    %250 = math.exp %249 : vector<2x32xf32>
    %cst_47 = arith.constant 1.000000e+00 : f32
    %251 = vector.broadcast %cst_47 : f32 to vector<2x32xf32>
    %252 = arith.addf %251, %250 : vector<2x32xf32>
    %253 = arith.divf %251, %252 : vector<2x32xf32>
    %254 = vector.extract_strided_slice %242 {offsets = [0, 32], sizes = [2, 32], strides = [1, 1]} : vector<2x96xf32> to vector<2x32xf32>
    %255 = vector.extract_strided_slice %245 {offsets = [0, 32], sizes = [2, 32], strides = [1, 1]} : vector<2x96xf32> to vector<2x32xf32>
    %256 = arith.addf %254, %255 : vector<2x32xf32>
    %257 = arith.negf %256 : vector<2x32xf32>
    %258 = math.exp %257 : vector<2x32xf32>
    %cst_48 = arith.constant 1.000000e+00 : f32
    %259 = vector.broadcast %cst_48 : f32 to vector<2x32xf32>
    %260 = arith.addf %259, %258 : vector<2x32xf32>
    %261 = arith.divf %259, %260 : vector<2x32xf32>
    %262 = vector.extract_strided_slice %242 {offsets = [0, 64], sizes = [2, 32], strides = [1, 1]} : vector<2x96xf32> to vector<2x32xf32>
    %263 = vector.extract_strided_slice %245 {offsets = [0, 64], sizes = [2, 32], strides = [1, 1]} : vector<2x96xf32> to vector<2x32xf32>
    %264 = arith.mulf %253, %263 : vector<2x32xf32>
    %265 = arith.addf %262, %264 : vector<2x32xf32>
    %266 = math.tanh %265 : vector<2x32xf32>
    %cst_49 = arith.constant 1.000000e+00 : f32
    %267 = vector.broadcast %cst_49 : f32 to vector<2x32xf32>
    %268 = arith.subf %267, %261 : vector<2x32xf32>
    %269 = arith.mulf %268, %266 : vector<2x32xf32>
    %270 = arith.mulf %261, %241 : vector<2x32xf32>
    %271 = arith.addf %269, %270 : vector<2x32xf32>
    %c0_50 = arith.constant 0 : index
    %c0_51 = arith.constant 0 : index
    %272 = vector.load %arg6[%c0_50, %c0_51] : memref<32x32xf32, #tpu.memory_space<vmem>>, vector<32x32xf32>
    %cst_52 = arith.constant dense<0.000000e+00> : vector<2x32xf32>
    %273 = tpu.matmul %271, %272, %cst_52 {dimension_numbers = #tpu.dot_dimension_numbers<[1], [0], [0], [1], [0, 0, 1, 1], [], []>} : vector<2x32xf32>, vector<32x32xf32>, vector<2x32xf32> -> vector<2x32xf32>
    %c0_53 = arith.constant 0 : index
    %c0_54 = arith.constant 0 : index
    %274 = vector.load %arg7[%c0_53, %c0_54] : memref<1x32xf32, #tpu.memory_space<vmem>>, vector<1x32xf32>
    %275 = vector.broadcast %274 : vector<1x32xf32> to vector<2x32xf32>
    %276 = arith.addf %273, %275 : vector<2x32xf32>
    %277 = math.tanh %276 : vector<2x32xf32>
    %c0_55 = arith.constant 0 : index
    %c0_56 = arith.constant 0 : index
    %278 = vector.load %arg8[%c0_55, %c0_56] : memref<2x32xf32, #tpu.memory_space<vmem>>, vector<2x32xf32>
    tpu.vector_store %arg8[%c0_55, %c0_56], %277 {strides = array<i32>} : memref<2x32xf32, #tpu.memory_space<vmem>>, vector<2x32xf32>,
    return
  }
}

</mosaic_0001>

<llo_original>
// kernel: tpu_custom_call.1
$region0: #{tpu_custom_call.1}
  #allocation0 [shape = 'u32[]', space=smem, size = 0x4, offset = 0x4, fixed_abs, tag = 'smem constant byte address 0x4 - core index']
  #allocation1 [shape = 'u32[144,128]{1,0:T(1,128)}', space=vmem, size = 0x12000, scoped, tag = 'internal scratch']
  %s0 = inlined_call_operand.vmem [shape: s32[8,2], index: 0, kind: input, shape index: {}]
  %s1 = inlined_call_operand.vmem [shape: f32[50,32], index: 1, kind: input, shape index: {}]
  %s2 = inlined_call_operand.vmem [shape: f32[32,96], index: 2, kind: input, shape index: {}]
  %s3 = inlined_call_operand.vmem [shape: f32[32,96], index: 3, kind: input, shape index: {}]
  %s4 = inlined_call_operand.vmem [shape: f32[1,96], index: 4, kind: input, shape index: {}]
  %s5 = inlined_call_operand.vmem [shape: f32[1,96], index: 5, kind: input, shape index: {}]
  %s6 = inlined_call_operand.vmem [shape: f32[32,32], index: 6, kind: input, shape index: {}]
  %s7 = inlined_call_operand.vmem [shape: f32[1,32], index: 7, kind: input, shape index: {}]
  %s8 = inlined_call_operand.hbm [shape: f32[2,32], index: 8, kind: output, shape index: {}]
  %s9 = sld [smem:[#allocation0]]
  $region42: #{tpu_custom_call.1} parent=0
    _
  %s11 = ssub.s32 1, %s9
  %s12 = scalar_select 0, %s11, %s9
  $region1: #{tpu_custom_call.1} parent=0
    #allocation2 [shape = 'u8[1024]{0}', space=vmem, size = 0x400, scoped, tag = 'output window, operand 0, single buffered']
    #allocation3 [shape = 's32[1]{0}', space=sflag, size = 0x4, scoped, tag = 'scoped memory for tpu_custom_call.1']
    %13 = vsyncpa [#allocation3], 0
    // Predicated region
    $region2: #{tpu_custom_call.1} parent=1 // pred_check
      _
    $region3: #{tpu_custom_call.1} parent=1 // pred_check_branch
      %15 = sbr.rel (0) target = $region5
    $region4: #{tpu_custom_call.1} parent=1 // pred_region
      _
    $region5: #{tpu_custom_call.1} parent=1 // pred_fallthru
      _
    // Predicated region
    $region6: #{tpu_custom_call.1} parent=1 // pred_check
      _
    $region7: #{tpu_custom_call.1} parent=1 // pred_check_branch
      %17 = sbr.rel (0) target = $region9
    $region8: #{tpu_custom_call.1} parent=1 // pred_region
      _
    $region9: #{tpu_custom_call.1} parent=1 // pred_fallthru
      _
    // Predicated region
    $region10: #{tpu_custom_call.1} parent=1 // pred_check
      _
    $region11: #{tpu_custom_call.1} parent=1 // pred_check_branch
      %19 = sbr.rel (0) target = $region13
    $region12: #{tpu_custom_call.1} parent=1 // pred_region
      _
    $region13: #{tpu_custom_call.1} parent=1 // pred_fallthru
      _
    // Predicated region
    $region14: #{tpu_custom_call.1} parent=1 // pred_check
      _
    $region15: #{tpu_custom_call.1} parent=1 // pred_check_branch
      %21 = sbr.rel (0) target = $region17
    $region16: #{tpu_custom_call.1} parent=1 // pred_region
      _
    $region17: #{tpu_custom_call.1} parent=1 // pred_fallthru
      _
    // Predicated region
    $region18: #{tpu_custom_call.1} parent=1 // pred_check
      _
    $region19: #{tpu_custom_call.1} parent=1 // pred_check_branch
      %23 = sbr.rel (0) target = $region21
    $region20: #{tpu_custom_call.1} parent=1 // pred_region
      _
    $region21: #{tpu_custom_call.1} parent=1 // pred_fallthru
      _
    // Predicated region
    $region22: #{tpu_custom_call.1} parent=1 // pred_check
      _
    $region23: #{tpu_custom_call.1} parent=1 // pred_check_branch
      %25 = sbr.rel (0) target = $region25
    $region24: #{tpu_custom_call.1} parent=1 // pred_region
      _
    $region25: #{tpu_custom_call.1} parent=1 // pred_fallthru
      _
    // Predicated region
    $region26: #{tpu_custom_call.1} parent=1 // pred_check
      _
    $region27: #{tpu_custom_call.1} parent=1 // pred_check_branch
      %27 = sbr.rel (0) target = $region29
    $region28: #{tpu_custom_call.1} parent=1 // pred_region
      _
    $region29: #{tpu_custom_call.1} parent=1 // pred_fallthru
      _
    // Predicated region
    $region30: #{tpu_custom_call.1} parent=1 // pred_check
      _
    $region31: #{tpu_custom_call.1} parent=1 // pred_check_branch
      %29 = sbr.rel (0) target = $region33
    $region32: #{tpu_custom_call.1} parent=1 // pred_region
      _
    $region33: #{tpu_custom_call.1} parent=1 // pred_fallthru
      _
    %v30 = vld [vmem:[%s0] sm:$0xff]
    %v31 = vld [vmem:[%s1] sm:$0xff]
    %v32 = vld [vmem:[%s1 + $0x8] sm:$0xff]
    %v33 = vld [vmem:[%s1 + $0x10] sm:$0xff]
    %v34 = vld [vmem:[%s1 + $0x18] sm:$0xff]
    %v35 = vld [vmem:[%s1 + $0x20] sm:$0xff]
    %v36 = vld [vmem:[%s1 + $0x28] sm:$0xff]
    %v37 = vld [vmem:[%s1 + $0x30] sm:$0x3]
    %v38 = vlaneseq
    %v39 = vand.u32 %v38, 127
    %v40 = vlaneseq
    %v41 = vshrl.u32 %v40, 7
    %v42 = vsub.s32 0, %v41
    %v43 = vrot.slane %v30, %v42
    %45 = vbcast.lane.b32.xlu0 %v43, 256
    %v46 = vpop.permute.xlu0 %45
    %v47 = vlaneseq
    %v48 = vshrl.u32 %v47, 7
    %v49 = vsub.s32 1, %v48
    %v50 = vrot.slane %v30, %v49
    %52 = vbcast.lane.b32.xlu0 %v50, 256
    %v53 = vpop.permute.xlu0 %52
    %v54 = vlaneseq
    %v55 = vshrl.u32 %v54, 7
    %v56 = vsub.s32 2, %v55
    %v57 = vrot.slane %v30, %v56
    %59 = vbcast.lane.b32.xlu0 %v57, 256
    %v60 = vpop.permute.xlu0 %59
    %v61 = vlaneseq
    %v62 = vshrl.u32 %v61, 7
    %v63 = vsub.s32 3, %v62
    %v64 = vrot.slane %v30, %v63
    %66 = vbcast.lane.b32.xlu0 %v64, 256
    %v67 = vpop.permute.xlu0 %66
    %v68 = vlaneseq
    %v69 = vshrl.u32 %v68, 7
    %v70 = vsub.s32 4, %v69
    %v71 = vrot.slane %v30, %v70
    %73 = vbcast.lane.b32.xlu0 %v71, 256
    %v74 = vpop.permute.xlu0 %73
    %v75 = vlaneseq
    %v76 = vshrl.u32 %v75, 7
    %v77 = vsub.s32 5, %v76
    %v78 = vrot.slane %v30, %v77
    %80 = vbcast.lane.b32.xlu0 %v78, 256
    %v81 = vpop.permute.xlu0 %80
    %v82 = vlaneseq
    %v83 = vshrl.u32 %v82, 7
    %v84 = vsub.s32 6, %v83
    %v85 = vrot.slane %v30, %v84
    %87 = vbcast.lane.b32.xlu0 %v85, 256
    %v88 = vpop.permute.xlu0 %87
    %v89 = vlaneseq
    %v90 = vshrl.u32 %v89, 7
    %v91 = vsub.s32 7, %v90
    %v92 = vrot.slane %v30, %v91
    %94 = vbcast.lane.b32.xlu0 %v92, 256
    %v95 = vpop.permute.xlu0 %94
    %vm96 = vcmp.eq.s32.totalorder %v46, %v39
    %vm97 = vcmp.eq.s32.totalorder %v53, %v39
    %vm98 = vcmp.eq.s32.totalorder %v60, %v39
    %vm99 = vcmp.eq.s32.totalorder %v67, %v39
    %vm100 = vcmp.eq.s32.totalorder %v74, %v39
    %vm101 = vcmp.eq.s32.totalorder %v81, %v39
    %vm102 = vcmp.eq.s32.totalorder %v88, %v39
    %vm103 = vcmp.eq.s32.totalorder %v95, %v39
    %v104 = vsel %vm96, 1, 0
    %v105 = vsel %vm97, 1, 0
    %v106 = vsel %vm98, 1, 0
    %v107 = vsel %vm99, 1, 0
    %v108 = vsel %vm100, 1, 0
    %v109 = vsel %vm101, 1, 0
    %v110 = vsel %vm102, 1, 0
    %v111 = vsel %vm103, 1, 0
    %v112 = vcvt.s32.f32 %v104
    %v113 = vcvt.s32.f32 %v105
    %v114 = vcvt.s32.f32 %v106
    %v115 = vcvt.s32.f32 %v107
    %v116 = vcvt.s32.f32 %v108
    %v117 = vcvt.s32.f32 %v109
    %v118 = vcvt.s32.f32 %v110
    %v119 = vcvt.s32.f32 %v111
    %v128 = vcombine.low %v112, %v113
    %v129 = vcombine.low %v114, %v115
    %v131 = vunpack.c.l.s4 1983009808
    %v132 = vunpack.c.0.s8 %v131
    %v133 = vlaneseq
    %v134 = vshrl.u32 %v133, 7
    %v135 = vsub.s32 %v132, %v134
    %v136 = vrot.slane %v128, %v135
    %v138 = vunpack.c.l.s4 1983009808
    %v139 = vunpack.c.0.s8 %v138
    %v140 = vlaneseq
    %v141 = vshrl.u32 %v140, 7
    %v142 = vsub.s32 %v139, %v141
    %v143 = vrot.slane %v129, %v142
    %v144 = vcombine.low %v136, %v143
    %v145 = vcombine.low %v116, %v117
    %v146 = vcombine.low %v118, %v119
    %v148 = vunpack.c.l.s4 1983009808
    %v149 = vunpack.c.0.s8 %v148
    %v150 = vlaneseq
    %v151 = vshrl.u32 %v150, 7
    %v152 = vsub.s32 %v149, %v151
    %v153 = vrot.slane %v145, %v152
    %v155 = vunpack.c.l.s4 1983009808
    %v156 = vunpack.c.0.s8 %v155
    %v157 = vlaneseq
    %v158 = vshrl.u32 %v157, 7
    %v159 = vsub.s32 %v156, %v158
    %v160 = vrot.slane %v146, %v159
    %v161 = vcombine.low %v153, %v160
    %vm162 = vcmask 408576
    %v163 = vsel %vm162, %v144, 0
    %v165 = vsel %vm162, %v161, 0
    %vm167 = vcmask 1041408
    %v169 = vsel %vm167, %v37, 0
    %171 = vmatprep.subr.mxu0 0.0
    %172 = vmatpush1.msra.mxu0 %v31
    %173 = vmatprep.subr.mxu0 0.0
    %174 = vmatpush1.msra.mxu0 %v32
    %175 = vmatprep.subr.mxu0 0.0
    %176 = vmatpush1.msra.mxu0 %v33
    %177 = vmatprep.subr.mxu0 0.0
    %178 = vmatpush1.msra.mxu0 %v34
    %179 = vmatprep.subr.mxu0 0.0
    %180 = vmatpush1.msra.mxu0 %v35
    %181 = vmatprep.subr.mxu0 0.0
    %182 = vmatpush1.msra.mxu0 %v36
    %183 = vmatprep.subr.mxu0 0.0
    %184 = vmatpush1.msra.mxu0 %v169
    %185 = vmatprep.subr.mxu0 0.0
    %186 = vmatpush1.msra.mxu0 0.0
    %187 = vmatprep.subr.mxu0 0.0
    %188 = vmatpush1.msra.mxu0 0.0
    %189 = vmatprep.subr.mxu0 0.0
    %190 = vmatpush1.msra.mxu0 0.0
    %191 = vmatprep.subr.mxu0 0.0
    %192 = vmatpush1.msra.mxu0 0.0
    %193 = vmatprep.subr.mxu0 0.0
    %194 = vmatpush1.msra.mxu0 0.0
    %195 = vmatprep.subr.mxu0 0.0
    %196 = vmatpush1.msra.mxu0 0.0
    %197 = vmatprep.subr.mxu0 0.0
    %198 = vmatpush1.msra.mxu0 0.0
    %199 = vmatprep.subr.mxu0 0.0
    %200 = vmatpush1.msra.mxu0 0.0
    %201 = vmatprep.subr.mxu0 0.0
    %202 = vmatpush1.msra.mxu0 0.0
    %203 = vmatprep.subr.mxu0 0.0
    %204 = vmatpush1.msra.mxu0 0.0
    %205 = vmatprep.subr.mxu0 0.0
    %206 = vmatpush1.msra.mxu0 0.0
    %207 = vmatprep.subr.mxu0 0.0
    %208 = vmatpush1.msra.mxu0 0.0
    %209 = vmatprep.subr.mxu0 0.0
    %210 = vmatpush1.msra.mxu0 0.0
    %211 = vmatprep.subr.mxu0 0.0
    %212 = vmatpush1.msra.mxu0 0.0
    %213 = vmatprep.subr.mxu0 0.0
    %214 = vmatpush1.msra.mxu0 0.0
    %215 = vmatprep.subr.mxu0 0.0
    %216 = vmatpush1.msra.mxu0 0.0
    %217 = vmatprep.subr.mxu0 0.0
    %218 = vmatpush1.msra.mxu0 0.0
    %219 = vmatprep.subr.mxu0 0.0
    %220 = vmatpush1.msra.mxu0 0.0
    %221 = vmatprep.subr.mxu0 0.0
    %222 = vmatpush1.msra.mxu0 0.0
    %223 = vmatprep.subr.mxu0 0.0
    %224 = vmatpush1.msra.mxu0 0.0
    %225 = vmatprep.subr.mxu0 0.0
    %226 = vmatpush1.msra.mxu0 0.0
    %227 = vmatprep.subr.mxu0 0.0
    %228 = vmatpush1.msra.mxu0 0.0
    %229 = vmatprep.subr.mxu0 0.0
    %230 = vmatpush1.msra.mxu0 0.0
    %231 = vmatprep.subr.mxu0 0.0
    %232 = vmatpush1.msra.mxu0 0.0
    %233 = vmatprep.subr.mxu0 0.0
    %234 = vmatpush1.msra.mxu0 0.0
    %235 = vmatprep.mubr.f32.mxu0 0.0
    %236 = vmatmul.mubr.f32.gmra.mrb[0].mxu0 %v163
    %v237 = vpop.f32.mrb[0].mxu0
    %v238 = vadd.f32 0.0, %v237
    %v239 = vpop.f32.mrb[0].mxu0
    %240 = vmatprep.mubr.f32.mxu0 0.0
    %241 = vmatmul.mubr.f32.gmra.mrb[0].mxu0 %v165
    %v242 = vpop.f32.mrb[0].mxu0
    %v243 = vadd.f32 0.0, %v242
    %v244 = vpop.f32.mrb[0].mxu0
    %245 = vdwg.mxu0
    %v246 = vmul.f32 %v238, %v238
    %v247 = vmul.f32 %v243, %v243
    %vm248 = vcmask 261120
    %v249 = vsel %vm248, %v246, 0.0
    %250 = vadd.xlane.f32.xlu0 %v249
    %v251 = vpop.xlane.xlu0 %250
    %v252 = vsel %vm248, %v247, 0.0
    %253 = vadd.xlane.f32.xlu0 %v252
    %v254 = vpop.xlane.xlu0 %253
    %v255 = vrsqrt.pop %v251
    %v256 = vmul.f32 %v251, %v255
    %vm257 = vcmp.eq.f32.partialorder %v251, inf
    %v258 = vsel %vm257, %v251, %v256
    %vm259 = vcmp.eq.f32.partialorder %v251, 0.0
    %v260 = vand.u32 %v251, 2147483648
    %v261 = vsel %vm259, %v260, %v258
    %v262 = vrsqrt.pop %v254
    %v263 = vmul.f32 %v254, %v262
    %vm264 = vcmp.eq.f32.partialorder %v254, inf
    %v265 = vsel %vm264, %v254, %v263
    %vm266 = vcmp.eq.f32.partialorder %v254, 0.0
    %v267 = vand.u32 %v254, 2147483648
    %v268 = vsel %vm266, %v267, %v265
    %vm269 = vcmp.gt.f32.partialorder %v261, 1.0
    %vm270 = vcmp.gt.f32.partialorder %v268, 1.0
    %v271 = vadd.f32 %v261, 1e-07
    %v272 = vadd.f32 %v268, 1e-07
    %v273 = vrcp.pop %v271
    %v274 = vmul.f32 1.0, %v273
    %v275 = vrcp.pop %v272
    %v276 = vmul.f32 1.0, %v275
    %v277 = vsel %vm269, %v274, 1.0
    %v278 = vsel %vm270, %v276, 1.0
    %v279 = vmul.f32 %v238, %v277
    %v280 = vmul.f32 %v243, %v278
    %v281 = vld [vmem:[%s2] sm:$0xff]
    %v282 = vld [vmem:[%s2 + $0x8] sm:$0xff]
    %v283 = vld [vmem:[%s2 + $0x10] sm:$0xff]
    %v284 = vld [vmem:[%s2 + $0x18] sm:$0xff]
    %v285 = vld [vmem:[%s4] sm:$0x1]
    %v287 = vlaneseq
    %v288 = vshrl.u32 %v287, 7
    %v289 = vsub.s32 0, %v288
    %v290 = vrot.slane %v285, %v289
    %v293 = vsel %vm248, %v279, 0
    %v296 = vsel %vm248, %v280, 0
    %298 = vmatprep.subr.mxu0 0.0
    %299 = vmatpush1.msra.mxu0 %v281
    %300 = vmatprep.subr.mxu0 0.0
    %301 = vmatpush1.msra.mxu0 %v282
    %302 = vmatprep.subr.mxu0 0.0
    %303 = vmatpush1.msra.mxu0 %v283
    %304 = vmatprep.subr.mxu0 0.0
    %305 = vmatpush1.msra.mxu0 %v284
    %306 = vmatprep.subr.mxu0 0.0
    %307 = vmatpush1.msra.mxu0 0.0
    %308 = vmatprep.subr.mxu0 0.0
    %309 = vmatpush1.msra.mxu0 0.0
    %310 = vmatprep.subr.mxu0 0.0
    %311 = vmatpush1.msra.mxu0 0.0
    %312 = vmatprep.subr.mxu0 0.0
    %313 = vmatpush1.msra.mxu0 0.0
    %314 = vmatprep.subr.mxu0 0.0
    %315 = vmatpush1.msra.mxu0 0.0
    %316 = vmatprep.subr.mxu0 0.0
    %317 = vmatpush1.msra.mxu0 0.0
    %318 = vmatprep.subr.mxu0 0.0
    %319 = vmatpush1.msra.mxu0 0.0
    %320 = vmatprep.subr.mxu0 0.0
    %321 = vmatpush1.msra.mxu0 0.0
    %322 = vmatprep.subr.mxu0 0.0
    %323 = vmatpush1.msra.mxu0 0.0
    %324 = vmatprep.subr.mxu0 0.0
    %325 = vmatpush1.msra.mxu0 0.0
    %326 = vmatprep.subr.mxu0 0.0
    %327 = vmatpush1.msra.mxu0 0.0
    %328 = vmatprep.subr.mxu0 0.0
    %329 = vmatpush1.msra.mxu0 0.0
    %330 = vmatprep.subr.mxu0 0.0
    %331 = vmatpush1.msra.mxu0 0.0
    %332 = vmatprep.subr.mxu0 0.0
    %333 = vmatpush1.msra.mxu0 0.0
    %334 = vmatprep.subr.mxu0 0.0
    %335 = vmatpush1.msra.mxu0 0.0
    %336 = vmatprep.subr.mxu0 0.0
    %337 = vmatpush1.msra.mxu0 0.0
    %338 = vmatprep.subr.mxu0 0.0
    %339 = vmatpush1.msra.mxu0 0.0
    %340 = vmatprep.subr.mxu0 0.0
    %341 = vmatpush1.msra.mxu0 0.0
    %342 = vmatprep.subr.mxu0 0.0
    %343 = vmatpush1.msra.mxu0 0.0
    %344 = vmatprep.subr.mxu0 0.0
    %345 = vmatpush1.msra.mxu0 0.0
    %346 = vmatprep.subr.mxu0 0.0
    %347 = vmatpush1.msra.mxu0 0.0
    %348 = vmatprep.subr.mxu0 0.0
    %349 = vmatpush1.msra.mxu0 0.0
    %350 = vmatprep.subr.mxu0 0.0
    %351 = vmatpush1.msra.mxu0 0.0
    %352 = vmatprep.subr.mxu0 0.0
    %353 = vmatpush1.msra.mxu0 0.0
    %354 = vmatprep.subr.mxu0 0.0
    %355 = vmatpush1.msra.mxu0 0.0
    %356 = vmatprep.subr.mxu0 0.0
    %357 = vmatpush1.msra.mxu0 0.0
    %358 = vmatprep.subr.mxu0 0.0
    %359 = vmatpush1.msra.mxu0 0.0
    %360 = vmatprep.subr.mxu0 0.0
    %361 = vmatpush1.msra.mxu0 0.0
    %362 = vmatprep.mubr.f32.mxu0 0.0
    %363 = vmatmul.mubr.f32.gmra.mrb[0].mxu0 %v293
    %v364 = vpop.f32.mrb[0].mxu0
    %v365 = vadd.f32 %v290, %v364
    %v366 = vpop.f32.mrb[0].mxu0
    %367 = vmatprep.mubr.f32.mxu0 0.0
    %368 = vmatmul.mubr.f32.gmra.mrb[0].mxu0 %v296
    %v369 = vpop.f32.mrb[0].mxu0
    %v370 = vadd.f32 %v290, %v369
    %v371 = vpop.f32.mrb[0].mxu0
    %372 = vdwg.mxu0
    %v373 = vld [vmem:[%s3] sm:$0xff]
    %v374 = vld [vmem:[%s3 + $0x8] sm:$0xff]
    %v375 = vld [vmem:[%s3 + $0x10] sm:$0xff]
    %v376 = vld [vmem:[%s3 + $0x18] sm:$0xff]
    %v377 = vld [vmem:[%s5] sm:$0x1]
    %v379 = vlaneseq
    %v380 = vshrl.u32 %v379, 7
    %v381 = vsub.s32 0, %v380
    %v382 = vrot.slane %v377, %v381
    %v385 = vsel %vm248, 0.0, 0
    %387 = vmatprep.subr.mxu0 0.0
    %388 = vmatpush1.msra.mxu0 %v373
    %389 = vmatprep.subr.mxu0 0.0
    %390 = vmatpush1.msra.mxu0 %v374
    %391 = vmatprep.subr.mxu0 0.0
    %392 = vmatpush1.msra.mxu0 %v375
    %393 = vmatprep.subr.mxu0 0.0
    %394 = vmatpush1.msra.mxu0 %v376
    %395 = vmatprep.subr.mxu0 0.0
    %396 = vmatpush1.msra.mxu0 0.0
    %397 = vmatprep.subr.mxu0 0.0
    %398 = vmatpush1.msra.mxu0 0.0
    %399 = vmatprep.subr.mxu0 0.0
    %400 = vmatpush1.msra.mxu0 0.0
    %401 = vmatprep.subr.mxu0 0.0
    %402 = vmatpush1.msra.mxu0 0.0
    %403 = vmatprep.subr.mxu0 0.0
    %404 = vmatpush1.msra.mxu0 0.0
    %405 = vmatprep.subr.mxu0 0.0
    %406 = vmatpush1.msra.mxu0 0.0
    %407 = vmatprep.subr.mxu0 0.0
    %408 = vmatpush1.msra.mxu0 0.0
    %409 = vmatprep.subr.mxu0 0.0
    %410 = vmatpush1.msra.mxu0 0.0
    %411 = vmatprep.subr.mxu0 0.0
    %412 = vmatpush1.msra.mxu0 0.0
    %413 = vmatprep.subr.mxu0 0.0
    %414 = vmatpush1.msra.mxu0 0.0
    %415 = vmatprep.subr.mxu0 0.0
    %416 = vmatpush1.msra.mxu0 0.0
    %417 = vmatprep.subr.mxu0 0.0
    %418 = vmatpush1.msra.mxu0 0.0
    %419 = vmatprep.subr.mxu0 0.0
    %420 = vmatpush1.msra.mxu0 0.0
    %421 = vmatprep.subr.mxu0 0.0
    %422 = vmatpush1.msra.mxu0 0.0
    %423 = vmatprep.subr.mxu0 0.0
    %424 = vmatpush1.msra.mxu0 0.0
    %425 = vmatprep.subr.mxu0 0.0
    %426 = vmatpush1.msra.mxu0 0.0
    %427 = vmatprep.subr.mxu0 0.0
    %428 = vmatpush1.msra.mxu0 0.0
    %429 = vmatprep.subr.mxu0 0.0
    %430 = vmatpush1.msra.mxu0 0.0
    %431 = vmatprep.subr.mxu0 0.0
    %432 = vmatpush1.msra.mxu0 0.0
    %433 = vmatprep.subr.mxu0 0.0
    %434 = vmatpush1.msra.mxu0 0.0
    %435 = vmatprep.subr.mxu0 0.0
    %436 = vmatpush1.msra.mxu0 0.0
    %437 = vmatprep.subr.mxu0 0.0
    %438 = vmatpush1.msra.mxu0 0.0
    %439 = vmatprep.subr.mxu0 0.0
    %440 = vmatpush1.msra.mxu0 0.0
    %441 = vmatprep.subr.mxu0 0.0
    %442 = vmatpush1.msra.mxu0 0.0
    %443 = vmatprep.subr.mxu0 0.0
    %444 = vmatpush1.msra.mxu0 0.0
    %445 = vmatprep.subr.mxu0 0.0
    %446 = vmatpush1.msra.mxu0 0.0
    %447 = vmatprep.subr.mxu0 0.0
    %448 = vmatpush1.msra.mxu0 0.0
    %449 = vmatprep.subr.mxu0 0.0
    %450 = vmatpush1.msra.mxu0 0.0
    %451 = vmatprep.mubr.f32.mxu0 0.0
    %452 = vmatmul.mubr.f32.gmra.mrb[0].mxu0 %v385
    %v453 = vpop.f32.mrb[0].mxu0
    %v454 = vadd.f32 %v382, %v453
    %v455 = vpop.f32.mrb[0].mxu0
    %456 = vdwg.mxu0
    %v457 = vadd.f32 %v365, %v454
    %v458 = vxor.u32 %v457, 2147483648
    %v459 = vmul.f32 %v458, 1.442695
    %v460 = vpow.pop %v459
    %v461 = vadd.f32 %v460, 1.0
    %v462 = vrcp.pop %v461
    %v463 = vmul.f32 1.0, %v462
    %465 = vrot.lane.b32.xlu0 %v454, 64
    %v466 = vpop.permute.xlu0 %465
    %v468 = vmul.f32 %v463, %v466
    %470 = vrot.lane.b32.xlu0 %v468, 64
    %v471 = vpop.permute.xlu0 %470
    %v473 = vadd.f32 %v365, %v471
    %v474 = vtanh.pop %v473
    %v475 = vsub.f32 1.0, %v463
    %477 = vrot.lane.b32.xlu0 %v474, 96
    %v478 = vpop.permute.xlu0 %477
    %v480 = vmul.f32 %v475, %v478
    %v481 = vmul.f32 %v463, 0.0
    %v482 = vadd.f32 %v480, %v481
    %484 = vrot.lane.b32.xlu0 %v482, 96
    %v485 = vpop.permute.xlu0 %484
    %v486 = vsel %vm248, %v485, 0
    %488 = vmatprep.subr.mxu0 0.0
    %489 = vmatpush1.msra.mxu0 %v373
    %490 = vmatprep.subr.mxu0 0.0
    %491 = vmatpush1.msra.mxu0 %v374
    %492 = vmatprep.subr.mxu0 0.0
    %493 = vmatpush1.msra.mxu0 %v375
    %494 = vmatprep.subr.mxu0 0.0
    %495 = vmatpush1.msra.mxu0 %v376
    %496 = vmatprep.subr.mxu0 0.0
    %497 = vmatpush1.msra.mxu0 0.0
    %498 = vmatprep.subr.mxu0 0.0
    %499 = vmatpush1.msra.mxu0 0.0
    %500 = vmatprep.subr.mxu0 0.0
    %501 = vmatpush1.msra.mxu0 0.0
    %502 = vmatprep.subr.mxu0 0.0
    %503 = vmatpush1.msra.mxu0 0.0
    %504 = vmatprep.subr.mxu0 0.0
    %505 = vmatpush1.msra.mxu0 0.0
    %506 = vmatprep.subr.mxu0 0.0
    %507 = vmatpush1.msra.mxu0 0.0
    %508 = vmatprep.subr.mxu0 0.0
    %509 = vmatpush1.msra.mxu0 0.0
    %510 = vmatprep.subr.mxu0 0.0
    %511 = vmatpush1.msra.mxu0 0.0
    %512 = vmatprep.subr.mxu0 0.0
    %513 = vmatpush1.msra.mxu0 0.0
    %514 = vmatprep.subr.mxu0 0.0
    %515 = vmatpush1.msra.mxu0 0.0
    %516 = vmatprep.subr.mxu0 0.0
    %517 = vmatpush1.msra.mxu0 0.0
    %518 = vmatprep.subr.mxu0 0.0
    %519 = vmatpush1.msra.mxu0 0.0
    %520 = vmatprep.subr.mxu0 0.0
    %521 = vmatpush1.msra.mxu0 0.0
    %522 = vmatprep.subr.mxu0 0.0
    %523 = vmatpush1.msra.mxu0 0.0
    %524 = vmatprep.subr.mxu0 0.0
    %525 = vmatpush1.msra.mxu0 0.0
    %526 = vmatprep.subr.mxu0 0.0
    %527 = vmatpush1.msra.mxu0 0.0
    %528 = vmatprep.subr.mxu0 0.0
    %529 = vmatpush1.msra.mxu0 0.0
    %530 = vmatprep.subr.mxu0 0.0
    %531 = vmatpush1.msra.mxu0 0.0
    %532 = vmatprep.subr.mxu0 0.0
    %533 = vmatpush1.msra.mxu0 0.0
    %534 = vmatprep.subr.mxu0 0.0
    %535 = vmatpush1.msra.mxu0 0.0
    %536 = vmatprep.subr.mxu0 0.0
    %537 = vmatpush1.msra.mxu0 0.0
    %538 = vmatprep.subr.mxu0 0.0
    %539 = vmatpush1.msra.mxu0 0.0
    %540 = vmatprep.subr.mxu0 0.0
    %541 = vmatpush1.msra.mxu0 0.0
    %542 = vmatprep.subr.mxu0 0.0
    %543 = vmatpush1.msra.mxu0 0.0
    %544 = vmatprep.subr.mxu0 0.0
    %545 = vmatpush1.msra.mxu0 0.0
    %546 = vmatprep.subr.mxu0 0.0
    %547 = vmatpush1.msra.mxu0 0.0
    %548 = vmatprep.subr.mxu0 0.0
    %549 = vmatpush1.msra.mxu0 0.0
    %550 = vmatprep.subr.mxu0 0.0
    %551 = vmatpush1.msra.mxu0 0.0
    %552 = vmatprep.mubr.f32.mxu0 0.0
    %553 = vmatmul.mubr.f32.gmra.mrb[0].mxu0 %v486
    %v554 = vpop.f32.mrb[0].mxu0
    %v555 = vadd.f32 %v382, %v554
    %v556 = vpop.f32.mrb[0].mxu0
    %557 = vdwg.mxu0
    %v559 = vrot.slane %v555, 6
    %v561 = vadd.f32 %v365, %v559
    %v562 = vxor.u32 %v561, 2147483648
    %v563 = vmul.f32 %v562, 1.442695
    %v564 = vpow.pop %v563
    %v565 = vadd.f32 %v564, 1.0
    %v566 = vrcp.pop %v565
    %v567 = vmul.f32 1.0, %v566
    %568 = vrot.lane.b32.xlu0 %v559, 64
    %v569 = vpop.permute.xlu0 %568
    %v571 = vmul.f32 %v567, %v569
    %573 = vrot.lane.b32.xlu0 %v571, 64
    %v574 = vpop.permute.xlu0 %573
    %v576 = vadd.f32 %v365, %v574
    %v577 = vtanh.pop %v576
    %v578 = vsub.f32 1.0, %v567
    %580 = vrot.lane.b32.xlu0 %v577, 96
    %v581 = vpop.permute.xlu0 %580
    %v583 = vmul.f32 %v578, %v581
    %v584 = vrot.slane %v482, 6
    %v586 = vmul.f32 %v567, %v584
    %v587 = vadd.f32 %v583, %v586
    %v589 = vrot.slane %v587, 2
    %590 = vrot.lane.b32.xlu0 %v589, 96
    %v591 = vpop.permute.xlu0 %590
    %v592 = vsel %vm248, %v591, 0
    %594 = vmatprep.subr.mxu0 0.0
    %595 = vmatpush1.msra.mxu0 %v373
    %596 = vmatprep.subr.mxu0 0.0
    %597 = vmatpush1.msra.mxu0 %v374
    %598 = vmatprep.subr.mxu0 0.0
    %599 = vmatpush1.msra.mxu0 %v375
    %600 = vmatprep.subr.mxu0 0.0
    %601 = vmatpush1.msra.mxu0 %v376
    %602 = vmatprep.subr.mxu0 0.0
    %603 = vmatpush1.msra.mxu0 0.0
    %604 = vmatprep.subr.mxu0 0.0
    %605 = vmatpush1.msra.mxu0 0.0
    %606 = vmatprep.subr.mxu0 0.0
    %607 = vmatpush1.msra.mxu0 0.0
    %608 = vmatprep.subr.mxu0 0.0
    %609 = vmatpush1.msra.mxu0 0.0
    %610 = vmatprep.subr.mxu0 0.0
    %611 = vmatpush1.msra.mxu0 0.0
    %612 = vmatprep.subr.mxu0 0.0
    %613 = vmatpush1.msra.mxu0 0.0
    %614 = vmatprep.subr.mxu0 0.0
    %615 = vmatpush1.msra.mxu0 0.0
    %616 = vmatprep.subr.mxu0 0.0
    %617 = vmatpush1.msra.mxu0 0.0
    %618 = vmatprep.subr.mxu0 0.0
    %619 = vmatpush1.msra.mxu0 0.0
    %620 = vmatprep.subr.mxu0 0.0
    %621 = vmatpush1.msra.mxu0 0.0
    %622 = vmatprep.subr.mxu0 0.0
    %623 = vmatpush1.msra.mxu0 0.0
    %624 = vmatprep.subr.mxu0 0.0
    %625 = vmatpush1.msra.mxu0 0.0
    %626 = vmatprep.subr.mxu0 0.0
    %627 = vmatpush1.msra.mxu0 0.0
    %628 = vmatprep.subr.mxu0 0.0
    %629 = vmatpush1.msra.mxu0 0.0
    %630 = vmatprep.subr.mxu0 0.0
    %631 = vmatpush1.msra.mxu0 0.0
    %632 = vmatprep.subr.mxu0 0.0
    %633 = vmatpush1.msra.mxu0 0.0
    %634 = vmatprep.subr.mxu0 0.0
    %635 = vmatpush1.msra.mxu0 0.0
    %636 = vmatprep.subr.mxu0 0.0
    %637 = vmatpush1.msra.mxu0 0.0
    %638 = vmatprep.subr.mxu0 0.0
    %639 = vmatpush1.msra.mxu0 0.0
    %640 = vmatprep.subr.mxu0 0.0
    %641 = vmatpush1.msra.mxu0 0.0
    %642 = vmatprep.subr.mxu0 0.0
    %643 = vmatpush1.msra.mxu0 0.0
    %644 = vmatprep.subr.mxu0 0.0
    %645 = vmatpush1.msra.mxu0 0.0
    %646 = vmatprep.subr.mxu0 0.0
    %647 = vmatpush1.msra.mxu0 0.0
    %648 = vmatprep.subr.mxu0 0.0
    %649 = vmatpush1.msra.mxu0 0.0
    %650 = vmatprep.subr.mxu0 0.0
    %651 = vmatpush1.msra.mxu0 0.0
    %652 = vmatprep.subr.mxu0 0.0
    %653 = vmatpush1.msra.mxu0 0.0
    %654 = vmatprep.subr.mxu0 0.0
    %655 = vmatpush1.msra.mxu0 0.0
    %656 = vmatprep.subr.mxu0 0.0
    %657 = vmatpush1.msra.mxu0 0.0
    %658 = vmatprep.mubr.f32.mxu0 0.0
    %659 = vmatmul.mubr.f32.gmra.mrb[0].mxu0 %v592
    %v660 = vpop.f32.mrb[0].mxu0
    %v661 = vadd.f32 %v382, %v660
    %v662 = vpop.f32.mrb[0].mxu0
    %663 = vdwg.mxu0
    %v665 = vrot.slane %v661, 4
    %v667 = vadd.f32 %v365, %v665
    %v668 = vxor.u32 %v667, 2147483648
    %v669 = vmul.f32 %v668, 1.442695
    %v670 = vpow.pop %v669
    %v671 = vadd.f32 %v670, 1.0
    %v672 = vrcp.pop %v671
    %v673 = vmul.f32 1.0, %v672
    %674 = vrot.lane.b32.xlu0 %v665, 64
    %v675 = vpop.permute.xlu0 %674
    %v677 = vmul.f32 %v673, %v675
    %679 = vrot.lane.b32.xlu0 %v677, 64
    %v680 = vpop.permute.xlu0 %679
    %v682 = vadd.f32 %v365, %v680
    %v683 = vtanh.pop %v682
    %v684 = vsub.f32 1.0, %v673
    %686 = vrot.lane.b32.xlu0 %v683, 96
    %v687 = vpop.permute.xlu0 %686
    %v689 = vmul.f32 %v684, %v687
    %v690 = vrot.slane %v587, 6
    %v692 = vmul.f32 %v673, %v690
    %v693 = vadd.f32 %v689, %v692
    %v695 = vrot.slane %v693, 4
    %696 = vrot.lane.b32.xlu0 %v695, 96
    %v697 = vpop.permute.xlu0 %696
    %v698 = vsel %vm248, %v697, 0
    %700 = vmatprep.subr.mxu0 0.0
    %701 = vmatpush1.msra.mxu0 %v373
    %702 = vmatprep.subr.mxu0 0.0
    %703 = vmatpush1.msra.mxu0 %v374
    %704 = vmatprep.subr.mxu0 0.0
    %705 = vmatpush1.msra.mxu0 %v375
    %706 = vmatprep.subr.mxu0 0.0
    %707 = vmatpush1.msra.mxu0 %v376
    %708 = vmatprep.subr.mxu0 0.0
    %709 = vmatpush1.msra.mxu0 0.0
    %710 = vmatprep.subr.mxu0 0.0
    %711 = vmatpush1.msra.mxu0 0.0
    %712 = vmatprep.subr.mxu0 0.0
    %713 = vmatpush1.msra.mxu0 0.0
    %714 = vmatprep.subr.mxu0 0.0
    %715 = vmatpush1.msra.mxu0 0.0
    %716 = vmatprep.subr.mxu0 0.0
    %717 = vmatpush1.msra.mxu0 0.0
    %718 = vmatprep.subr.mxu0 0.0
    %719 = vmatpush1.msra.mxu0 0.0
    %720 = vmatprep.subr.mxu0 0.0
    %721 = vmatpush1.msra.mxu0 0.0
    %722 = vmatprep.subr.mxu0 0.0
    %723 = vmatpush1.msra.mxu0 0.0
    %724 = vmatprep.subr.mxu0 0.0
    %725 = vmatpush1.msra.mxu0 0.0
    %726 = vmatprep.subr.mxu0 0.0
    %727 = vmatpush1.msra.mxu0 0.0
    %728 = vmatprep.subr.mxu0 0.0
    %729 = vmatpush1.msra.mxu0 0.0
    %730 = vmatprep.subr.mxu0 0.0
    %731 = vmatpush1.msra.mxu0 0.0
    %732 = vmatprep.subr.mxu0 0.0
    %733 = vmatpush1.msra.mxu0 0.0
    %734 = vmatprep.subr.mxu0 0.0
    %735 = vmatpush1.msra.mxu0 0.0
    %736 = vmatprep.subr.mxu0 0.0
    %737 = vmatpush1.msra.mxu0 0.0
    %738 = vmatprep.subr.mxu0 0.0
    %739 = vmatpush1.msra.mxu0 0.0
    %740 = vmatprep.subr.mxu0 0.0
    %741 = vmatpush1.msra.mxu0 0.0
    %742 = vmatprep.subr.mxu0 0.0
    %743 = vmatpush1.msra.mxu0 0.0
    %744 = vmatprep.subr.mxu0 0.0
    %745 = vmatpush1.msra.mxu0 0.0
    %746 = vmatprep.subr.mxu0 0.0
    %747 = vmatpush1.msra.mxu0 0.0
    %748 = vmatprep.subr.mxu0 0.0
    %749 = vmatpush1.msra.mxu0 0.0
    %750 = vmatprep.subr.mxu0 0.0
    %751 = vmatpush1.msra.mxu0 0.0
    %752 = vmatprep.subr.mxu0 0.0
    %753 = vmatpush1.msra.mxu0 0.0
    %754 = vmatprep.subr.mxu0 0.0
    %755 = vmatpush1.msra.mxu0 0.0
    %756 = vmatprep.subr.mxu0 0.0
    %757 = vmatpush1.msra.mxu0 0.0
    %758 = vmatprep.subr.mxu0 0.0
    %759 = vmatpush1.msra.mxu0 0.0
    %760 = vmatprep.subr.mxu0 0.0
    %761 = vmatpush1.msra.mxu0 0.0
    %762 = vmatprep.subr.mxu0 0.0
    %763 = vmatpush1.msra.mxu0 0.0
    %764 = vmatprep.mubr.f32.mxu0 0.0
    %765 = vmatmul.mubr.f32.gmra.mrb[0].mxu0 %v698
    %v766 = vpop.f32.mrb[0].mxu0
    %v767 = vadd.f32 %v382, %v766
    %v768 = vpop.f32.mrb[0].mxu0
    %769 = vdwg.mxu0
    %v771 = vrot.slane %v767, 2
    %v773 = vadd.f32 %v365, %v771
    %v774 = vxor.u32 %v773, 2147483648
    %v775 = vmul.f32 %v774, 1.442695
    %v776 = vpow.pop %v775
    %v777 = vadd.f32 %v776, 1.0
    %v778 = vrcp.pop %v777
    %v779 = vmul.f32 1.0, %v778
    %780 = vrot.lane.b32.xlu0 %v771, 64
    %v781 = vpop.permute.xlu0 %780
    %v783 = vmul.f32 %v779, %v781
    %785 = vrot.lane.b32.xlu0 %v783, 64
    %v786 = vpop.permute.xlu0 %785
    %v788 = vadd.f32 %v365, %v786
    %v789 = vtanh.pop %v788
    %v790 = vsub.f32 1.0, %v779
    %792 = vrot.lane.b32.xlu0 %v789, 96
    %v793 = vpop.permute.xlu0 %792
    %v795 = vmul.f32 %v790, %v793
    %v796 = vrot.slane %v693, 6
    %v798 = vmul.f32 %v779, %v796
    %v799 = vadd.f32 %v795, %v798
    %v801 = vrot.slane %v799, 6
    %802 = vrot.lane.b32.xlu0 %v801, 96
    %v803 = vpop.permute.xlu0 %802
    %v804 = vsel %vm248, %v803, 0
    %806 = vmatprep.subr.mxu0 0.0
    %807 = vmatpush1.msra.mxu0 %v373
    %808 = vmatprep.subr.mxu0 0.0
    %809 = vmatpush1.msra.mxu0 %v374
    %810 = vmatprep.subr.mxu0 0.0
    %811 = vmatpush1.msra.mxu0 %v375
    %812 = vmatprep.subr.mxu0 0.0
    %813 = vmatpush1.msra.mxu0 %v376
    %814 = vmatprep.subr.mxu0 0.0
    %815 = vmatpush1.msra.mxu0 0.0
    %816 = vmatprep.subr.mxu0 0.0
    %817 = vmatpush1.msra.mxu0 0.0
    %818 = vmatprep.subr.mxu0 0.0
    %819 = vmatpush1.msra.mxu0 0.0
    %820 = vmatprep.subr.mxu0 0.0
    %821 = vmatpush1.msra.mxu0 0.0
    %822 = vmatprep.subr.mxu0 0.0
    %823 = vmatpush1.msra.mxu0 0.0
    %824 = vmatprep.subr.mxu0 0.0
    %825 = vmatpush1.msra.mxu0 0.0
    %826 = vmatprep.subr.mxu0 0.0
    %827 = vmatpush1.msra.mxu0 0.0
    %828 = vmatprep.subr.mxu0 0.0
    %829 = vmatpush1.msra.mxu0 0.0
    %830 = vmatprep.subr.mxu0 0.0
    %831 = vmatpush1.msra.mxu0 0.0
    %832 = vmatprep.subr.mxu0 0.0
    %833 = vmatpush1.msra.mxu0 0.0
    %834 = vmatprep.subr.mxu0 0.0
    %835 = vmatpush1.msra.mxu0 0.0
    %836 = vmatprep.subr.mxu0 0.0
    %837 = vmatpush1.msra.mxu0 0.0
    %838 = vmatprep.subr.mxu0 0.0
    %839 = vmatpush1.msra.mxu0 0.0
    %840 = vmatprep.subr.mxu0 0.0
    %841 = vmatpush1.msra.mxu0 0.0
    %842 = vmatprep.subr.mxu0 0.0
    %843 = vmatpush1.msra.mxu0 0.0
    %844 = vmatprep.subr.mxu0 0.0
    %845 = vmatpush1.msra.mxu0 0.0
    %846 = vmatprep.subr.mxu0 0.0
    %847 = vmatpush1.msra.mxu0 0.0
    %848 = vmatprep.subr.mxu0 0.0
    %849 = vmatpush1.msra.mxu0 0.0
    %850 = vmatprep.subr.mxu0 0.0
    %851 = vmatpush1.msra.mxu0 0.0
    %852 = vmatprep.subr.mxu0 0.0
    %853 = vmatpush1.msra.mxu0 0.0
    %854 = vmatprep.subr.mxu0 0.0
    %855 = vmatpush1.msra.mxu0 0.0
    %856 = vmatprep.subr.mxu0 0.0
    %857 = vmatpush1.msra.mxu0 0.0
    %858 = vmatprep.subr.mxu0 0.0
    %859 = vmatpush1.msra.mxu0 0.0
    %860 = vmatprep.subr.mxu0 0.0
    %861 = vmatpush1.msra.mxu0 0.0
    %862 = vmatprep.subr.mxu0 0.0
    %863 = vmatpush1.msra.mxu0 0.0
    %864 = vmatprep.subr.mxu0 0.0
    %865 = vmatpush1.msra.mxu0 0.0
    %866 = vmatprep.subr.mxu0 0.0
    %867 = vmatpush1.msra.mxu0 0.0
    %868 = vmatprep.subr.mxu0 0.0
    %869 = vmatpush1.msra.mxu0 0.0
    %870 = vmatprep.mubr.f32.mxu0 0.0
    %871 = vmatmul.mubr.f32.gmra.mrb[0].mxu0 %v804
    %v872 = vpop.f32.mrb[0].mxu0
    %v873 = vadd.f32 %v382, %v872
    %v874 = vpop.f32.mrb[0].mxu0
    %875 = vdwg.mxu0
    %v876 = vadd.f32 %v370, %v873
    %v877 = vxor.u32 %v876, 2147483648
    %v878 = vmul.f32 %v877, 1.442695
    %v879 = vpow.pop %v878
    %v880 = vadd.f32 %v879, 1.0
    %v881 = vrcp.pop %v880
    %v882 = vmul.f32 1.0, %v881
    %884 = vrot.lane.b32.xlu0 %v873, 64
    %v885 = vpop.permute.xlu0 %884
    %v887 = vmul.f32 %v882, %v885
    %889 = vrot.lane.b32.xlu0 %v887, 64
    %v890 = vpop.permute.xlu0 %889
    %v892 = vadd.f32 %v370, %v890
    %v893 = vtanh.pop %v892
    %v894 = vsub.f32 1.0, %v882
    %896 = vrot.lane.b32.xlu0 %v893, 96
    %v897 = vpop.permute.xlu0 %896
    %v899 = vmul.f32 %v894, %v897
    %v901 = vmul.f32 %v882, %v801
    %v902 = vadd.f32 %v899, %v901
    %904 = vrot.lane.b32.xlu0 %v902, 96
    %v905 = vpop.permute.xlu0 %904
    %v906 = vsel %vm248, %v905, 0
    %908 = vmatprep.subr.mxu0 0.0
    %909 = vmatpush1.msra.mxu0 %v373
    %910 = vmatprep.subr.mxu0 0.0
    %911 = vmatpush1.msra.mxu0 %v374
    %912 = vmatprep.subr.mxu0 0.0
    %913 = vmatpush1.msra.mxu0 %v375
    %914 = vmatprep.subr.mxu0 0.0
    %915 = vmatpush1.msra.mxu0 %v376
    %916 = vmatprep.subr.mxu0 0.0
    %917 = vmatpush1.msra.mxu0 0.0
    %918 = vmatprep.subr.mxu0 0.0
    %919 = vmatpush1.msra.mxu0 0.0
    %920 = vmatprep.subr.mxu0 0.0
    %921 = vmatpush1.msra.mxu0 0.0
    %922 = vmatprep.subr.mxu0 0.0
    %923 = vmatpush1.msra.mxu0 0.0
    %924 = vmatprep.subr.mxu0 0.0
    %925 = vmatpush1.msra.mxu0 0.0
    %926 = vmatprep.subr.mxu0 0.0
    %927 = vmatpush1.msra.mxu0 0.0
    %928 = vmatprep.subr.mxu0 0.0
    %929 = vmatpush1.msra.mxu0 0.0
    %930 = vmatprep.subr.mxu0 0.0
    %931 = vmatpush1.msra.mxu0 0.0
    %932 = vmatprep.subr.mxu0 0.0
    %933 = vmatpush1.msra.mxu0 0.0
    %934 = vmatprep.subr.mxu0 0.0
    %935 = vmatpush1.msra.mxu0 0.0
    %936 = vmatprep.subr.mxu0 0.0
    %937 = vmatpush1.msra.mxu0 0.0
    %938 = vmatprep.subr.mxu0 0.0
    %939 = vmatpush1.msra.mxu0 0.0
    %940 = vmatprep.subr.mxu0 0.0
    %941 = vmatpush1.msra.mxu0 0.0
    %942 = vmatprep.subr.mxu0 0.0
    %943 = vmatpush1.msra.mxu0 0.0
    %944 = vmatprep.subr.mxu0 0.0
    %945 = vmatpush1.msra.mxu0 0.0
    %946 = vmatprep.subr.mxu0 0.0
    %947 = vmatpush1.msra.mxu0 0.0
    %948 = vmatprep.subr.mxu0 0.0
    %949 = vmatpush1.msra.mxu0 0.0
    %950 = vmatprep.subr.mxu0 0.0
    %951 = vmatpush1.msra.mxu0 0.0
    %952 = vmatprep.subr.mxu0 0.0
    %953 = vmatpush1.msra.mxu0 0.0
    %954 = vmatprep.subr.mxu0 0.0
    %955 = vmatpush1.msra.mxu0 0.0
    %956 = vmatprep.subr.mxu0 0.0
    %957 = vmatpush1.msra.mxu0 0.0
    %958 = vmatprep.subr.mxu0 0.0
    %959 = vmatpush1.msra.mxu0 0.0
    %960 = vmatprep.subr.mxu0 0.0
    %961 = vmatpush1.msra.mxu0 0.0
    %962 = vmatprep.subr.mxu0 0.0
    %963 = vmatpush1.msra.mxu0 0.0
    %964 = vmatprep.subr.mxu0 0.0
    %965 = vmatpush1.msra.mxu0 0.0
    %966 = vmatprep.subr.mxu0 0.0
    %967 = vmatpush1.msra.mxu0 0.0
    %968 = vmatprep.subr.mxu0 0.0
    %969 = vmatpush1.msra.mxu0 0.0
    %970 = vmatprep.subr.mxu0 0.0
    %971 = vmatpush1.msra.mxu0 0.0
    %972 = vmatprep.mubr.f32.mxu0 0.0
    %973 = vmatmul.mubr.f32.gmra.mrb[0].mxu0 %v906
    %v974 = vpop.f32.mrb[0].mxu0
    %v975 = vadd.f32 %v382, %v974
    %v976 = vpop.f32.mrb[0].mxu0
    %977 = vdwg.mxu0
    %v979 = vrot.slane %v975, 6
    %v981 = vadd.f32 %v370, %v979
    %v982 = vxor.u32 %v981, 2147483648
    %v983 = vmul.f32 %v982, 1.442695
    %v984 = vpow.pop %v983
    %v985 = vadd.f32 %v984, 1.0
    %v986 = vrcp.pop %v985
    %v987 = vmul.f32 1.0, %v986
    %988 = vrot.lane.b32.xlu0 %v979, 64
    %v989 = vpop.permute.xlu0 %988
    %v991 = vmul.f32 %v987, %v989
    %993 = vrot.lane.b32.xlu0 %v991, 64
    %v994 = vpop.permute.xlu0 %993
    %v996 = vadd.f32 %v370, %v994
    %v997 = vtanh.pop %v996
    %v998 = vsub.f32 1.0, %v987
    %1000 = vrot.lane.b32.xlu0 %v997, 96
    %v1001 = vpop.permute.xlu0 %1000
    %v1003 = vmul.f32 %v998, %v1001
    %v1004 = vrot.slane %v902, 6
    %v1006 = vmul.f32 %v987, %v1004
    %v1007 = vadd.f32 %v1003, %v1006
    %v1009 = vrot.slane %v1007, 2
    %1010 = vrot.lane.b32.xlu0 %v1009, 96
    %v1011 = vpop.permute.xlu0 %1010
    %v1012 = vsel %vm248, %v1011, 0
    %1014 = vmatprep.subr.mxu0 0.0
    %1015 = vmatpush1.msra.mxu0 %v373
    %1016 = vmatprep.subr.mxu0 0.0
    %1017 = vmatpush1.msra.mxu0 %v374
    %1018 = vmatprep.subr.mxu0 0.0
    %1019 = vmatpush1.msra.mxu0 %v375
    %1020 = vmatprep.subr.mxu0 0.0
    %1021 = vmatpush1.msra.mxu0 %v376
    %1022 = vmatprep.subr.mxu0 0.0
    %1023 = vmatpush1.msra.mxu0 0.0
    %1024 = vmatprep.subr.mxu0 0.0
    %1025 = vmatpush1.msra.mxu0 0.0
    %1026 = vmatprep.subr.mxu0 0.0
    %1027 = vmatpush1.msra.mxu0 0.0
    %1028 = vmatprep.subr.mxu0 0.0
    %1029 = vmatpush1.msra.mxu0 0.0
    %1030 = vmatprep.subr.mxu0 0.0
    %1031 = vmatpush1.msra.mxu0 0.0
    %1032 = vmatprep.subr.mxu0 0.0
    %1033 = vmatpush1.msra.mxu0 0.0
    %1034 = vmatprep.subr.mxu0 0.0
    %1035 = vmatpush1.msra.mxu0 0.0
    %1036 = vmatprep.subr.mxu0 0.0
    %1037 = vmatpush1.msra.mxu0 0.0
    %1038 = vmatprep.subr.mxu0 0.0
    %1039 = vmatpush1.msra.mxu0 0.0
    %1040 = vmatprep.subr.mxu0 0.0
    %1041 = vmatpush1.msra.mxu0 0.0
    %1042 = vmatprep.subr.mxu0 0.0
    %1043 = vmatpush1.msra.mxu0 0.0
    %1044 = vmatprep.subr.mxu0 0.0
    %1045 = vmatpush1.msra.mxu0 0.0
    %1046 = vmatprep.subr.mxu0 0.0
    %1047 = vmatpush1.msra.mxu0 0.0
    %1048 = vmatprep.subr.mxu0 0.0
    %1049 = vmatpush1.msra.mxu0 0.0
    %1050 = vmatprep.subr.mxu0 0.0
    %1051 = vmatpush1.msra.mxu0 0.0
    %1052 = vmatprep.subr.mxu0 0.0
    %1053 = vmatpush1.msra.mxu0 0.0
    %1054 = vmatprep.subr.mxu0 0.0
    %1055 = vmatpush1.msra.mxu0 0.0
    %1056 = vmatprep.subr.mxu0 0.0
    %1057 = vmatpush1.msra.mxu0 0.0
    %1058 = vmatprep.subr.mxu0 0.0
    %1059 = vmatpush1.msra.mxu0 0.0
    %1060 = vmatprep.subr.mxu0 0.0
    %1061 = vmatpush1.msra.mxu0 0.0
    %1062 = vmatprep.subr.mxu0 0.0
    %1063 = vmatpush1.msra.mxu0 0.0
    %1064 = vmatprep.subr.mxu0 0.0
    %1065 = vmatpush1.msra.mxu0 0.0
    %1066 = vmatprep.subr.mxu0 0.0
    %1067 = vmatpush1.msra.mxu0 0.0
    %1068 = vmatprep.subr.mxu0 0.0
    %1069 = vmatpush1.msra.mxu0 0.0
    %1070 = vmatprep.subr.mxu0 0.0
    %1071 = vmatpush1.msra.mxu0 0.0
    %1072 = vmatprep.subr.mxu0 0.0
    %1073 = vmatpush1.msra.mxu0 0.0
    %1074 = vmatprep.subr.mxu0 0.0
    %1075 = vmatpush1.msra.mxu0 0.0
    %1076 = vmatprep.subr.mxu0 0.0
    %1077 = vmatpush1.msra.mxu0 0.0
    %1078 = vmatprep.mubr.f32.mxu0 0.0
    %1079 = vmatmul.mubr.f32.gmra.mrb[0].mxu0 %v1012
    %v1080 = vpop.f32.mrb[0].mxu0
    %v1081 = vadd.f32 %v382, %v1080
    %v1082 = vpop.f32.mrb[0].mxu0
    %1083 = vdwg.mxu0
    %v1085 = vrot.slane %v1081, 4
    %v1087 = vadd.f32 %v370, %v1085
    %v1088 = vxor.u32 %v1087, 2147483648
    %v1089 = vmul.f32 %v1088, 1.442695
    %v1090 = vpow.pop %v1089
    %v1091 = vadd.f32 %v1090, 1.0
    %v1092 = vrcp.pop %v1091
    %v1093 = vmul.f32 1.0, %v1092
    %1094 = vrot.lane.b32.xlu0 %v1085, 64
    %v1095 = vpop.permute.xlu0 %1094
    %v1097 = vmul.f32 %v1093, %v1095
    %1099 = vrot.lane.b32.xlu0 %v1097, 64
    %v1100 = vpop.permute.xlu0 %1099
    %v1102 = vadd.f32 %v370, %v1100
    %v1103 = vtanh.pop %v1102
    %v1104 = vsub.f32 1.0, %v1093
    %1106 = vrot.lane.b32.xlu0 %v1103, 96
    %v1107 = vpop.permute.xlu0 %1106
    %v1109 = vmul.f32 %v1104, %v1107
    %v1110 = vrot.slane %v1007, 6
    %v1112 = vmul.f32 %v1093, %v1110
    %v1113 = vadd.f32 %v1109, %v1112
    %v1115 = vrot.slane %v1113, 4
    %1116 = vrot.lane.b32.xlu0 %v1115, 96
    %v1117 = vpop.permute.xlu0 %1116
    %v1118 = vsel %vm248, %v1117, 0
    %1120 = vmatprep.subr.mxu0 0.0
    %1121 = vmatpush1.msra.mxu0 %v373
    %1122 = vmatprep.subr.mxu0 0.0
    %1123 = vmatpush1.msra.mxu0 %v374
    %1124 = vmatprep.subr.mxu0 0.0
    %1125 = vmatpush1.msra.mxu0 %v375
    %1126 = vmatprep.subr.mxu0 0.0
    %1127 = vmatpush1.msra.mxu0 %v376
    %1128 = vmatprep.subr.mxu0 0.0
    %1129 = vmatpush1.msra.mxu0 0.0
    %1130 = vmatprep.subr.mxu0 0.0
    %1131 = vmatpush1.msra.mxu0 0.0
    %1132 = vmatprep.subr.mxu0 0.0
    %1133 = vmatpush1.msra.mxu0 0.0
    %1134 = vmatprep.subr.mxu0 0.0
    %1135 = vmatpush1.msra.mxu0 0.0
    %1136 = vmatprep.subr.mxu0 0.0
    %1137 = vmatpush1.msra.mxu0 0.0
    %1138 = vmatprep.subr.mxu0 0.0
    %1139 = vmatpush1.msra.mxu0 0.0
    %1140 = vmatprep.subr.mxu0 0.0
    %1141 = vmatpush1.msra.mxu0 0.0
    %1142 = vmatprep.subr.mxu0 0.0
    %1143 = vmatpush1.msra.mxu0 0.0
    %1144 = vmatprep.subr.mxu0 0.0
    %1145 = vmatpush1.msra.mxu0 0.0
    %1146 = vmatprep.subr.mxu0 0.0
    %1147 = vmatpush1.msra.mxu0 0.0
    %1148 = vmatprep.subr.mxu0 0.0
    %1149 = vmatpush1.msra.mxu0 0.0
    %1150 = vmatprep.subr.mxu0 0.0
    %1151 = vmatpush1.msra.mxu0 0.0
    %1152 = vmatprep.subr.mxu0 0.0
    %1153 = vmatpush1.msra.mxu0 0.0
    %1154 = vmatprep.subr.mxu0 0.0
    %1155 = vmatpush1.msra.mxu0 0.0
    %1156 = vmatprep.subr.mxu0 0.0
    %1157 = vmatpush1.msra.mxu0 0.0
    %1158 = vmatprep.subr.mxu0 0.0
    %1159 = vmatpush1.msra.mxu0 0.0
    %1160 = vmatprep.subr.mxu0 0.0
    %1161 = vmatpush1.msra.mxu0 0.0
    %1162 = vmatprep.subr.mxu0 0.0
    %1163 = vmatpush1.msra.mxu0 0.0
    %1164 = vmatprep.subr.mxu0 0.0
    %1165 = vmatpush1.msra.mxu0 0.0
    %1166 = vmatprep.subr.mxu0 0.0
    %1167 = vmatpush1.msra.mxu0 0.0
    %1168 = vmatprep.subr.mxu0 0.0
    %1169 = vmatpush1.msra.mxu0 0.0
    %1170 = vmatprep.subr.mxu0 0.0
    %1171 = vmatpush1.msra.mxu0 0.0
    %1172 = vmatprep.subr.mxu0 0.0
    %1173 = vmatpush1.msra.mxu0 0.0
    %1174 = vmatprep.subr.mxu0 0.0
    %1175 = vmatpush1.msra.mxu0 0.0
    %1176 = vmatprep.subr.mxu0 0.0
    %1177 = vmatpush1.msra.mxu0 0.0
    %1178 = vmatprep.subr.mxu0 0.0
    %1179 = vmatpush1.msra.mxu0 0.0
    %1180 = vmatprep.subr.mxu0 0.0
    %1181 = vmatpush1.msra.mxu0 0.0
    %1182 = vmatprep.subr.mxu0 0.0
    %1183 = vmatpush1.msra.mxu0 0.0
    %1184 = vmatprep.mubr.f32.mxu0 0.0
    %1185 = vmatmul.mubr.f32.gmra.mrb[0].mxu0 %v1118
    %v1186 = vpop.f32.mrb[0].mxu0
    %v1187 = vadd.f32 %v382, %v1186
    %v1188 = vpop.f32.mrb[0].mxu0
    %1189 = vdwg.mxu0
    %v1191 = vrot.slane %v1187, 2
    %v1193 = vadd.f32 %v370, %v1191
    %v1194 = vxor.u32 %v1193, 2147483648
    %v1195 = vmul.f32 %v1194, 1.442695
    %v1196 = vpow.pop %v1195
    %v1197 = vadd.f32 %v1196, 1.0
    %v1198 = vrcp.pop %v1197
    %v1199 = vmul.f32 1.0, %v1198
    %1200 = vrot.lane.b32.xlu0 %v1191, 64
    %v1201 = vpop.permute.xlu0 %1200
    %v1203 = vmul.f32 %v1199, %v1201
    %1205 = vrot.lane.b32.xlu0 %v1203, 64
    %v1206 = vpop.permute.xlu0 %1205
    %v1208 = vadd.f32 %v370, %v1206
    %v1209 = vtanh.pop %v1208
    %v1210 = vsub.f32 1.0, %v1199
    %1212 = vrot.lane.b32.xlu0 %v1209, 96
    %v1213 = vpop.permute.xlu0 %1212
    %v1215 = vmul.f32 %v1210, %v1213
    %v1216 = vrot.slane %v1113, 6
    %v1218 = vmul.f32 %v1199, %v1216
    %v1219 = vadd.f32 %v1215, %v1218
    %v1220 = vld [vmem:[%s6] sm:$0xff]
    %v1221 = vld [vmem:[%s6 + $0x8] sm:$0xff]
    %v1222 = vld [vmem:[%s6 + $0x10] sm:$0xff]
    %v1223 = vld [vmem:[%s6 + $0x18] sm:$0xff]
    %v1224 = vld [vmem:[%s7] sm:$0x1]
    %v1226 = vlaneseq
    %v1227 = vshrl.u32 %v1226, 7
    %v1228 = vsub.s32 0, %v1227
    %v1229 = vrot.slane %v1224, %v1228
    %v1232 = vrot.slane %v1219, 6
    %1233 = vrot.lane.b32.xlu0 %v1232, 96
    %v1234 = vpop.permute.xlu0 %1233
    %v1235 = vsel %vm248, %v1234, 0
    %1237 = vmatprep.subr.mxu0 0.0
    %1238 = vmatpush1.msra.mxu0 %v1220
    %1239 = vmatprep.subr.mxu0 0.0
    %1240 = vmatpush1.msra.mxu0 %v1221
    %1241 = vmatprep.subr.mxu0 0.0
    %1242 = vmatpush1.msra.mxu0 %v1222
    %1243 = vmatprep.subr.mxu0 0.0
    %1244 = vmatpush1.msra.mxu0 %v1223
    %1245 = vmatprep.subr.mxu0 0.0
    %1246 = vmatpush1.msra.mxu0 0.0
    %1247 = vmatprep.subr.mxu0 0.0
    %1248 = vmatpush1.msra.mxu0 0.0
    %1249 = vmatprep.subr.mxu0 0.0
    %1250 = vmatpush1.msra.mxu0 0.0
    %1251 = vmatprep.subr.mxu0 0.0
    %1252 = vmatpush1.msra.mxu0 0.0
    %1253 = vmatprep.subr.mxu0 0.0
    %1254 = vmatpush1.msra.mxu0 0.0
    %1255 = vmatprep.subr.mxu0 0.0
    %1256 = vmatpush1.msra.mxu0 0.0
    %1257 = vmatprep.subr.mxu0 0.0
    %1258 = vmatpush1.msra.mxu0 0.0
    %1259 = vmatprep.subr.mxu0 0.0
    %1260 = vmatpush1.msra.mxu0 0.0
    %1261 = vmatprep.subr.mxu0 0.0
    %1262 = vmatpush1.msra.mxu0 0.0
    %1263 = vmatprep.subr.mxu0 0.0
    %1264 = vmatpush1.msra.mxu0 0.0
    %1265 = vmatprep.subr.mxu0 0.0
    %1266 = vmatpush1.msra.mxu0 0.0
    %1267 = vmatprep.subr.mxu0 0.0
    %1268 = vmatpush1.msra.mxu0 0.0
    %1269 = vmatprep.subr.mxu0 0.0
    %1270 = vmatpush1.msra.mxu0 0.0
    %1271 = vmatprep.subr.mxu0 0.0
    %1272 = vmatpush1.msra.mxu0 0.0
    %1273 = vmatprep.subr.mxu0 0.0
    %1274 = vmatpush1.msra.mxu0 0.0
    %1275 = vmatprep.subr.mxu0 0.0
    %1276 = vmatpush1.msra.mxu0 0.0
    %1277 = vmatprep.subr.mxu0 0.0
    %1278 = vmatpush1.msra.mxu0 0.0
    %1279 = vmatprep.subr.mxu0 0.0
    %1280 = vmatpush1.msra.mxu0 0.0
    %1281 = vmatprep.subr.mxu0 0.0
    %1282 = vmatpush1.msra.mxu0 0.0
    %1283 = vmatprep.subr.mxu0 0.0
    %1284 = vmatpush1.msra.mxu0 0.0
    %1285 = vmatprep.subr.mxu0 0.0
    %1286 = vmatpush1.msra.mxu0 0.0
    %1287 = vmatprep.subr.mxu0 0.0
    %1288 = vmatpush1.msra.mxu0 0.0
    %1289 = vmatprep.subr.mxu0 0.0
    %1290 = vmatpush1.msra.mxu0 0.0
    %1291 = vmatprep.subr.mxu0 0.0
    %1292 = vmatpush1.msra.mxu0 0.0
    %1293 = vmatprep.subr.mxu0 0.0
    %1294 = vmatpush1.msra.mxu0 0.0
    %1295 = vmatprep.subr.mxu0 0.0
    %1296 = vmatpush1.msra.mxu0 0.0
    %1297 = vmatprep.subr.mxu0 0.0
    %1298 = vmatpush1.msra.mxu0 0.0
    %1299 = vmatprep.subr.mxu0 0.0
    %1300 = vmatpush1.msra.mxu0 0.0
    %1301 = vmatprep.mubr.f32.mxu0 0.0
    %1302 = vmatmul.mubr.f32.gmra.mrb[0].mxu0 %v1235
    %v1303 = vpop.f32.mrb[0].mxu0
    %v1304 = vadd.f32 %v1229, %v1303
    %v1305 = vpop.f32.mrb[0].mxu0
    %1306 = vdwg.mxu0
    %v1307 = vtanh.pop %v1304
    %vm1308 = vcmask 254976
    %1309 = vst.msk [vmem:[#allocation2] sm:$0x3] %vm1308, %v1307
    // Predicated region
    $region34: #{tpu_custom_call.1} parent=1 // pred_check
      _
    $region35: #{tpu_custom_call.1} parent=1 // pred_check_branch
      %1311 = sbr.rel (0) target = $region37
    $region36: #{tpu_custom_call.1} parent=1 // pred_region
      %s1313 = ssub.s32 32, 32
      %1314 = vsyncadd [#allocation3], %s1313
      %s1316 = sshll.u32 [#allocation2], 4
      %s1317 = int_to_ptr.vmem [resolvable:$true] %s1316
      %1319 = dma.vmem_to_hbm [thread:$0]  %s1317, 32, %s8, [#allocation3]
    $region37: #{tpu_custom_call.1} parent=1 // pred_fallthru
      _
    // Predicated region
    $region38: #{tpu_custom_call.1} parent=1 // pred_check
      _
    $region39: #{tpu_custom_call.1} parent=1 // pred_check_branch
      %1321 = sbr.rel (0) target = $region41
    $region40: #{tpu_custom_call.1} parent=1 // pred_region
      %1322 = dma.done [#allocation3], 32
    $region41: #{tpu_custom_call.1} parent=1 // pred_fallthru
      _
    %1323 = vsyncpa [#allocation3], 1

</llo_original>
